<compile_context>
chip_gen: v7x
topology: tpu7x:2x2x1
jax: 0.10.0
libtpu: 0.0.40
codegen_flags: <defaults>
</compile_context>

<pallas_src>
import functools

import jax
import jax.numpy as jnp
import numpy as np
from jax.experimental import pallas as pl
from jax.experimental.pallas import tpu as pltpu


def rnn_kernel(x_ref, *args, num_layers, seq_len, batch, hidden):
    """args = [wih_T_0, whh_T_0, bias_0, ..., wih_T_{L-1}, whh_T_{L-1}, bias_{L-1},
               wfc (T*H, C), bfc (1, C), out_ref (B, C),
               seq_ref (T*B, H) scratch, flat_ref (B, T*H) scratch]"""
    layer_refs = args[: 3 * num_layers]
    wfc_ref = args[3 * num_layers]          # (T*H, C)  == fc1.weight.T
    bfc_ref = args[3 * num_layers + 1]      # (1, C)
    out_ref = args[3 * num_layers + 2]      # (B, C)
    seq_ref = args[3 * num_layers + 3]      # (T*B, H): per-layer xw / layer outputs (row = t*B + b)
    flat_ref = args[3 * num_layers + 4]     # (B, T*H): last-layer outputs, flattened t-outer

    f32 = jnp.float32
    T, B, H = seq_len, batch, hidden

    for layer in range(num_layers):
        wih = layer_refs[3 * layer][...]      # (in_dim, H)  (already transposed)
        whh = layer_refs[3 * layer + 1][...]  # (H, H)       (already transposed)
        b = layer_refs[3 * layer + 2][...]    # (1, H)  == b_ih + b_hh
        is_last = layer == num_layers - 1

        # ---- Bulk, whole-sequence input projection (+ bias), off the serial path. ----
        xin = x_ref[...] if layer == 0 else seq_ref[...]          # (T*B, in_dim)
        seq_ref[...] = jnp.dot(xin, wih, preferred_element_type=f32) + b   # xw for all t

        # ---- Serial recurrence, fully unrolled. Only h @ W_hh + xw[t] + tanh per step. ----
        h = jnp.zeros((B, H), f32)
        for t in range(T):
            rows = pl.ds(t * B, B)                                # static slice: all batches at time t
            xw_t = seq_ref[rows, :]                               # precomputed x_t @ W_ih^T + bias
            h = jnp.tanh(xw_t + jnp.dot(h, whh, preferred_element_type=f32))
            if is_last:
                flat_ref[:, pl.ds(t * H, H)] = h                  # build (B, T*H) flatten, t-outer
            else:
                seq_ref[rows, :] = h                              # layer output -> next layer input

    # ---- fc1: single lane-dense (B, T*H) @ (T*H, C) matmul + bias. ----
    out_ref[...] = (jnp.dot(flat_ref[...], wfc_ref[...], preferred_element_type=f32)
                    + bfc_ref[...])


def rnn_forward(x, params, *, num_layers, hidden_size, num_classes):
    """x: (B, T, input_size) batch-first, float32. Returns (B, num_classes)."""
    B, T, D = x.shape
    H = hidden_size
    # Time-major, flattened to 2D: row index = t*B + b (matches kernel's pl.ds(t*B, B) slices).
    x_flat = jnp.transpose(x, (1, 0, 2)).reshape(T * B, D).astype(jnp.float32)

    inputs = [x_flat]
    for layer in range(num_layers):
        w_ih, w_hh, b_ih, b_hh = params["rnn"][layer]
        inputs.append(jnp.transpose(w_ih).astype(jnp.float32))            # (in_dim, H)
        inputs.append(jnp.transpose(w_hh).astype(jnp.float32))            # (H, H)
        inputs.append((b_ih + b_hh).reshape(1, H).astype(jnp.float32))    # fused bias
    w_fc, b_fc = params["fc"]                                             # (C, T*H), (C,)
    inputs.append(jnp.transpose(w_fc).astype(jnp.float32))                # (T*H, C)
    inputs.append(b_fc.reshape(1, num_classes).astype(jnp.float32))

    kernel = functools.partial(
        rnn_kernel, num_layers=num_layers, seq_len=T, batch=B, hidden=H)

    return pl.pallas_call(
        kernel,
        out_shape=jax.ShapeDtypeStruct((B, num_classes), jnp.float32),
        in_specs=[pl.BlockSpec(memory_space=pltpu.MemorySpace.VMEM)] * len(inputs),
        out_specs=pl.BlockSpec(memory_space=pltpu.MemorySpace.VMEM),
        scratch_shapes=[pltpu.VMEM((T * B, H), jnp.float32),   # xw / layer outputs
                        pltpu.VMEM((B, T * H), jnp.float32)],  # flattened last-layer outputs
    )(*inputs)


def init_params(key, input_size, hidden_size, num_layers, seq_len, num_classes):
    """Deterministic synthetic init mirroring PyTorch's U(-1/sqrt(fan), 1/sqrt(fan))."""
    k_rnn = 1.0 / np.sqrt(hidden_size)
    keys = jax.random.split(key, num_layers * 4 + 2)
    idx = 0
    rnn_layers = []
    for layer in range(num_layers):
        in_dim = input_size if layer == 0 else hidden_size
        w_ih = jax.random.uniform(keys[idx], (hidden_size, in_dim), minval=-k_rnn, maxval=k_rnn); idx += 1
        w_hh = jax.random.uniform(keys[idx], (hidden_size, hidden_size), minval=-k_rnn, maxval=k_rnn); idx += 1
        b_ih = jax.random.uniform(keys[idx], (hidden_size,), minval=-k_rnn, maxval=k_rnn); idx += 1
        b_hh = jax.random.uniform(keys[idx], (hidden_size,), minval=-k_rnn, maxval=k_rnn); idx += 1
        rnn_layers.append((w_ih, w_hh, b_ih, b_hh))
    k_fc = 1.0 / np.sqrt(hidden_size * seq_len)
    w_fc = jax.random.uniform(keys[idx], (num_classes, hidden_size * seq_len), minval=-k_fc, maxval=k_fc); idx += 1
    b_fc = jax.random.uniform(keys[idx], (num_classes,), minval=-k_fc, maxval=k_fc)
    return {"rnn": rnn_layers, "fc": (w_fc, b_fc)}


def rnn_reference(x, params, *, num_layers, hidden_size, num_classes):
    """Pure-JAX reference mirroring the PyTorch forward exactly."""
    B, T, _ = x.shape
    out = x
    for layer in range(num_layers):
        w_ih, w_hh, b_ih, b_hh = params["rnn"][layer]
        h = jnp.zeros((B, hidden_size), jnp.float32)
        ys = []
        for t in range(T):
            h = jnp.tanh(out[:, t, :] @ w_ih.T + b_ih + h @ w_hh.T + b_hh)
            ys.append(h)
        out = jnp.stack(ys, axis=1)          # (B, T, H)
    flat = out.reshape(B, -1)                # flatten (T, H) -> T*H, t outer
    w_fc, b_fc = params["fc"]
    return flat @ w_fc.T + b_fc


if __name__ == "__main__":
    batch = 2
    input_size = 16
    sequence_length = 8
    hidden_size = 32
    num_layers = 2
    num_classes = 10

    key = jax.random.PRNGKey(0)
    kx, kp = jax.random.split(key)
    x = jax.random.normal(kx, (batch, sequence_length, input_size), dtype=jnp.float32)
    params = init_params(kp, input_size, hidden_size, num_layers, sequence_length, num_classes)

    out = rnn_forward(x, params, num_layers=num_layers,
                      hidden_size=hidden_size, num_classes=num_classes)
    out = jax.block_until_ready(out)

    ref = rnn_reference(x, params, num_layers=num_layers,
                        hidden_size=hidden_size, num_classes=num_classes)
    np.testing.assert_allclose(np.asarray(out), np.asarray(ref), rtol=2e-2, atol=2e-2)

    print("KERNEL_OK")
</pallas_src>

<mosaic_0001>
module attributes {stable_mosaic.version = 11 : i64} {
  func.func @rnn_kernel(%arg0: memref<16x16xf32, #tpu.memory_space<vmem>>, %arg1: memref<16x32xf32, #tpu.memory_space<vmem>>, %arg2: memref<32x32xf32, #tpu.memory_space<vmem>>, %arg3: memref<1x32xf32, #tpu.memory_space<vmem>>, %arg4: memref<32x32xf32, #tpu.memory_space<vmem>>, %arg5: memref<32x32xf32, #tpu.memory_space<vmem>>, %arg6: memref<1x32xf32, #tpu.memory_space<vmem>>, %arg7: memref<256x10xf32, #tpu.memory_space<vmem>>, %arg8: memref<1x10xf32, #tpu.memory_space<vmem>>, %arg9: memref<2x10xf32, #tpu.memory_space<vmem>>, %arg10: memref<16x32xf32, #tpu.memory_space<vmem>>, %arg11: memref<2x256xf32, #tpu.memory_space<vmem>>) attributes {dimension_semantics = [], scalar_prefetch = 0 : i64, scratch_operands = 2 : i64, tpu.core_type = #tpu.core_type<tc>} {
    %c0 = arith.constant 0 : index
    %c0_0 = arith.constant 0 : index
    %0 = vector.load %arg1[%c0, %c0_0] : memref<16x32xf32, #tpu.memory_space<vmem>>, vector<16x32xf32>
    %c0_1 = arith.constant 0 : index
    %c0_2 = arith.constant 0 : index
    %1 = vector.load %arg2[%c0_1, %c0_2] : memref<32x32xf32, #tpu.memory_space<vmem>>, vector<32x32xf32>
    %c0_3 = arith.constant 0 : index
    %c0_4 = arith.constant 0 : index
    %2 = vector.load %arg3[%c0_3, %c0_4] : memref<1x32xf32, #tpu.memory_space<vmem>>, vector<1x32xf32>
    %c0_5 = arith.constant 0 : index
    %c0_6 = arith.constant 0 : index
    %3 = vector.load %arg0[%c0_5, %c0_6] : memref<16x16xf32, #tpu.memory_space<vmem>>, vector<16x16xf32>
    %cst = arith.constant dense<0.000000e+00> : vector<16x32xf32>
    %4 = tpu.matmul %3, %0, %cst {dimension_numbers = #tpu.dot_dimension_numbers<[1], [0], [0], [1], [0, 0, 1, 1], [], []>} : vector<16x16xf32>, vector<16x32xf32>, vector<16x32xf32> -> vector<16x32xf32>
    %5 = vector.broadcast %2 : vector<1x32xf32> to vector<16x32xf32>
    %6 = arith.addf %4, %5 : vector<16x32xf32>
    %c0_7 = arith.constant 0 : index
    %c0_8 = arith.constant 0 : index
    %7 = vector.load %arg10[%c0_7, %c0_8] : memref<16x32xf32, #tpu.memory_space<vmem>>, vector<16x32xf32>
    tpu.vector_store %arg10[%c0_7, %c0_8], %6 {strides = array<i32>} : memref<16x32xf32, #tpu.memory_space<vmem>>, vector<16x32xf32>,
    %cst_9 = arith.constant 0.000000e+00 : f32
    %8 = vector.broadcast %cst_9 : f32 to vector<2x32xf32>
    %c0_10 = arith.constant 0 : index
    %c0_11 = arith.constant 0 : index
    %9 = vector.load %arg10[%c0_10, %c0_11] : memref<16x32xf32, #tpu.memory_space<vmem>>, vector<2x32xf32>
    %cst_12 = arith.constant dense<0.000000e+00> : vector<2x32xf32>
    %10 = tpu.matmul %8, %1, %cst_12 {dimension_numbers = #tpu.dot_dimension_numbers<[1], [0], [0], [1], [0, 0, 1, 1], [], []>} : vector<2x32xf32>, vector<32x32xf32>, vector<2x32xf32> -> vector<2x32xf32>
    %11 = arith.addf %9, %10 : vector<2x32xf32>
    %12 = math.tanh %11 : vector<2x32xf32>
    %c0_13 = arith.constant 0 : index
    %c0_14 = arith.constant 0 : index
    %13 = vector.load %arg10[%c0_13, %c0_14] : memref<16x32xf32, #tpu.memory_space<vmem>>, vector<2x32xf32>
    tpu.vector_store %arg10[%c0_13, %c0_14], %12 {strides = array<i32>} : memref<16x32xf32, #tpu.memory_space<vmem>>, vector<2x32xf32>,
    %c2 = arith.constant 2 : index
    %c0_15 = arith.constant 0 : index
    %14 = vector.load %arg10[%c2, %c0_15] : memref<16x32xf32, #tpu.memory_space<vmem>>, vector<2x32xf32>
    %cst_16 = arith.constant dense<0.000000e+00> : vector<2x32xf32>
    %15 = tpu.matmul %12, %1, %cst_16 {dimension_numbers = #tpu.dot_dimension_numbers<[1], [0], [0], [1], [0, 0, 1, 1], [], []>} : vector<2x32xf32>, vector<32x32xf32>, vector<2x32xf32> -> vector<2x32xf32>
    %16 = arith.addf %14, %15 : vector<2x32xf32>
    %17 = math.tanh %16 : vector<2x32xf32>
    %c2_17 = arith.constant 2 : index
    %c0_18 = arith.constant 0 : index
    %18 = vector.load %arg10[%c2_17, %c0_18] : memref<16x32xf32, #tpu.memory_space<vmem>>, vector<2x32xf32>
    tpu.vector_store %arg10[%c2_17, %c0_18], %17 {strides = array<i32>} : memref<16x32xf32, #tpu.memory_space<vmem>>, vector<2x32xf32>,
    %c4 = arith.constant 4 : index
    %c0_19 = arith.constant 0 : index
    %19 = vector.load %arg10[%c4, %c0_19] : memref<16x32xf32, #tpu.memory_space<vmem>>, vector<2x32xf32>
    %cst_20 = arith.constant dense<0.000000e+00> : vector<2x32xf32>
    %20 = tpu.matmul %17, %1, %cst_20 {dimension_numbers = #tpu.dot_dimension_numbers<[1], [0], [0], [1], [0, 0, 1, 1], [], []>} : vector<2x32xf32>, vector<32x32xf32>, vector<2x32xf32> -> vector<2x32xf32>
    %21 = arith.addf %19, %20 : vector<2x32xf32>
    %22 = math.tanh %21 : vector<2x32xf32>
    %c4_21 = arith.constant 4 : index
    %c0_22 = arith.constant 0 : index
    %23 = vector.load %arg10[%c4_21, %c0_22] : memref<16x32xf32, #tpu.memory_space<vmem>>, vector<2x32xf32>
    tpu.vector_store %arg10[%c4_21, %c0_22], %22 {strides = array<i32>} : memref<16x32xf32, #tpu.memory_space<vmem>>, vector<2x32xf32>,
    %c6 = arith.constant 6 : index
    %c0_23 = arith.constant 0 : index
    %24 = vector.load %arg10[%c6, %c0_23] : memref<16x32xf32, #tpu.memory_space<vmem>>, vector<2x32xf32>
    %cst_24 = arith.constant dense<0.000000e+00> : vector<2x32xf32>
    %25 = tpu.matmul %22, %1, %cst_24 {dimension_numbers = #tpu.dot_dimension_numbers<[1], [0], [0], [1], [0, 0, 1, 1], [], []>} : vector<2x32xf32>, vector<32x32xf32>, vector<2x32xf32> -> vector<2x32xf32>
    %26 = arith.addf %24, %25 : vector<2x32xf32>
    %27 = math.tanh %26 : vector<2x32xf32>
    %c6_25 = arith.constant 6 : index
    %c0_26 = arith.constant 0 : index
    %28 = vector.load %arg10[%c6_25, %c0_26] : memref<16x32xf32, #tpu.memory_space<vmem>>, vector<2x32xf32>
    tpu.vector_store %arg10[%c6_25, %c0_26], %27 {strides = array<i32>} : memref<16x32xf32, #tpu.memory_space<vmem>>, vector<2x32xf32>,
    %c8 = arith.constant 8 : index
    %c0_27 = arith.constant 0 : index
    %29 = vector.load %arg10[%c8, %c0_27] : memref<16x32xf32, #tpu.memory_space<vmem>>, vector<2x32xf32>
    %cst_28 = arith.constant dense<0.000000e+00> : vector<2x32xf32>
    %30 = tpu.matmul %27, %1, %cst_28 {dimension_numbers = #tpu.dot_dimension_numbers<[1], [0], [0], [1], [0, 0, 1, 1], [], []>} : vector<2x32xf32>, vector<32x32xf32>, vector<2x32xf32> -> vector<2x32xf32>
    %31 = arith.addf %29, %30 : vector<2x32xf32>
    %32 = math.tanh %31 : vector<2x32xf32>
    %c8_29 = arith.constant 8 : index
    %c0_30 = arith.constant 0 : index
    %33 = vector.load %arg10[%c8_29, %c0_30] : memref<16x32xf32, #tpu.memory_space<vmem>>, vector<2x32xf32>
    tpu.vector_store %arg10[%c8_29, %c0_30], %32 {strides = array<i32>} : memref<16x32xf32, #tpu.memory_space<vmem>>, vector<2x32xf32>,
    %c10 = arith.constant 10 : index
    %c0_31 = arith.constant 0 : index
    %34 = vector.load %arg10[%c10, %c0_31] : memref<16x32xf32, #tpu.memory_space<vmem>>, vector<2x32xf32>
    %cst_32 = arith.constant dense<0.000000e+00> : vector<2x32xf32>
    %35 = tpu.matmul %32, %1, %cst_32 {dimension_numbers = #tpu.dot_dimension_numbers<[1], [0], [0], [1], [0, 0, 1, 1], [], []>} : vector<2x32xf32>, vector<32x32xf32>, vector<2x32xf32> -> vector<2x32xf32>
    %36 = arith.addf %34, %35 : vector<2x32xf32>
    %37 = math.tanh %36 : vector<2x32xf32>
    %c10_33 = arith.constant 10 : index
    %c0_34 = arith.constant 0 : index
    %38 = vector.load %arg10[%c10_33, %c0_34] : memref<16x32xf32, #tpu.memory_space<vmem>>, vector<2x32xf32>
    tpu.vector_store %arg10[%c10_33, %c0_34], %37 {strides = array<i32>} : memref<16x32xf32, #tpu.memory_space<vmem>>, vector<2x32xf32>,
    %c12 = arith.constant 12 : index
    %c0_35 = arith.constant 0 : index
    %39 = vector.load %arg10[%c12, %c0_35] : memref<16x32xf32, #tpu.memory_space<vmem>>, vector<2x32xf32>
    %cst_36 = arith.constant dense<0.000000e+00> : vector<2x32xf32>
    %40 = tpu.matmul %37, %1, %cst_36 {dimension_numbers = #tpu.dot_dimension_numbers<[1], [0], [0], [1], [0, 0, 1, 1], [], []>} : vector<2x32xf32>, vector<32x32xf32>, vector<2x32xf32> -> vector<2x32xf32>
    %41 = arith.addf %39, %40 : vector<2x32xf32>
    %42 = math.tanh %41 : vector<2x32xf32>
    %c12_37 = arith.constant 12 : index
    %c0_38 = arith.constant 0 : index
    %43 = vector.load %arg10[%c12_37, %c0_38] : memref<16x32xf32, #tpu.memory_space<vmem>>, vector<2x32xf32>
    tpu.vector_store %arg10[%c12_37, %c0_38], %42 {strides = array<i32>} : memref<16x32xf32, #tpu.memory_space<vmem>>, vector<2x32xf32>,
    %c14 = arith.constant 14 : index
    %c0_39 = arith.constant 0 : index
    %44 = vector.load %arg10[%c14, %c0_39] : memref<16x32xf32, #tpu.memory_space<vmem>>, vector<2x32xf32>
    %cst_40 = arith.constant dense<0.000000e+00> : vector<2x32xf32>
    %45 = tpu.matmul %42, %1, %cst_40 {dimension_numbers = #tpu.dot_dimension_numbers<[1], [0], [0], [1], [0, 0, 1, 1], [], []>} : vector<2x32xf32>, vector<32x32xf32>, vector<2x32xf32> -> vector<2x32xf32>
    %46 = arith.addf %44, %45 : vector<2x32xf32>
    %47 = math.tanh %46 : vector<2x32xf32>
    %c14_41 = arith.constant 14 : index
    %c0_42 = arith.constant 0 : index
    %48 = vector.load %arg10[%c14_41, %c0_42] : memref<16x32xf32, #tpu.memory_space<vmem>>, vector<2x32xf32>
    tpu.vector_store %arg10[%c14_41, %c0_42], %47 {strides = array<i32>} : memref<16x32xf32, #tpu.memory_space<vmem>>, vector<2x32xf32>,
    %c0_43 = arith.constant 0 : index
    %c0_44 = arith.constant 0 : index
    %49 = vector.load %arg4[%c0_43, %c0_44] : memref<32x32xf32, #tpu.memory_space<vmem>>, vector<32x32xf32>
    %c0_45 = arith.constant 0 : index
    %c0_46 = arith.constant 0 : index
    %50 = vector.load %arg5[%c0_45, %c0_46] : memref<32x32xf32, #tpu.memory_space<vmem>>, vector<32x32xf32>
    %c0_47 = arith.constant 0 : index
    %c0_48 = arith.constant 0 : index
    %51 = vector.load %arg6[%c0_47, %c0_48] : memref<1x32xf32, #tpu.memory_space<vmem>>, vector<1x32xf32>
    %c0_49 = arith.constant 0 : index
    %c0_50 = arith.constant 0 : index
    %52 = vector.load %arg10[%c0_49, %c0_50] : memref<16x32xf32, #tpu.memory_space<vmem>>, vector<16x32xf32>
    %cst_51 = arith.constant dense<0.000000e+00> : vector<16x32xf32>
    %53 = tpu.matmul %52, %49, %cst_51 {dimension_numbers = #tpu.dot_dimension_numbers<[1], [0], [0], [1], [0, 0, 1, 1], [], []>} : vector<16x32xf32>, vector<32x32xf32>, vector<16x32xf32> -> vector<16x32xf32>
    %54 = vector.broadcast %51 : vector<1x32xf32> to vector<16x32xf32>
    %55 = arith.addf %53, %54 : vector<16x32xf32>
    %c0_52 = arith.constant 0 : index
    %c0_53 = arith.constant 0 : index
    %56 = vector.load %arg10[%c0_52, %c0_53] : memref<16x32xf32, #tpu.memory_space<vmem>>, vector<16x32xf32>
    tpu.vector_store %arg10[%c0_52, %c0_53], %55 {strides = array<i32>} : memref<16x32xf32, #tpu.memory_space<vmem>>, vector<16x32xf32>,
    %cst_54 = arith.constant 0.000000e+00 : f32
    %57 = vector.broadcast %cst_54 : f32 to vector<2x32xf32>
    %c0_55 = arith.constant 0 : index
    %c0_56 = arith.constant 0 : index
    %58 = vector.load %arg10[%c0_55, %c0_56] : memref<16x32xf32, #tpu.memory_space<vmem>>, vector<2x32xf32>
    %cst_57 = arith.constant dense<0.000000e+00> : vector<2x32xf32>
    %59 = tpu.matmul %57, %50, %cst_57 {dimension_numbers = #tpu.dot_dimension_numbers<[1], [0], [0], [1], [0, 0, 1, 1], [], []>} : vector<2x32xf32>, vector<32x32xf32>, vector<2x32xf32> -> vector<2x32xf32>
    %60 = arith.addf %58, %59 : vector<2x32xf32>
    %61 = math.tanh %60 : vector<2x32xf32>
    %c0_58 = arith.constant 0 : index
    %c0_59 = arith.constant 0 : index
    %62 = vector.load %arg11[%c0_58, %c0_59] : memref<2x256xf32, #tpu.memory_space<vmem>>, vector<2x32xf32>
    tpu.vector_store %arg11[%c0_58, %c0_59], %61 {strides = array<i32>} : memref<2x256xf32, #tpu.memory_space<vmem>>, vector<2x32xf32>,
    %c2_60 = arith.constant 2 : index
    %c0_61 = arith.constant 0 : index
    %63 = vector.load %arg10[%c2_60, %c0_61] : memref<16x32xf32, #tpu.memory_space<vmem>>, vector<2x32xf32>
    %cst_62 = arith.constant dense<0.000000e+00> : vector<2x32xf32>
    %64 = tpu.matmul %61, %50, %cst_62 {dimension_numbers = #tpu.dot_dimension_numbers<[1], [0], [0], [1], [0, 0, 1, 1], [], []>} : vector<2x32xf32>, vector<32x32xf32>, vector<2x32xf32> -> vector<2x32xf32>
    %65 = arith.addf %63, %64 : vector<2x32xf32>
    %66 = math.tanh %65 : vector<2x32xf32>
    %c0_63 = arith.constant 0 : index
    %c32 = arith.constant 32 : index
    %67 = vector.load %arg11[%c0_63, %c32] : memref<2x256xf32, #tpu.memory_space<vmem>>, vector<2x32xf32>
    tpu.vector_store %arg11[%c0_63, %c32], %66 {strides = array<i32>} : memref<2x256xf32, #tpu.memory_space<vmem>>, vector<2x32xf32>,
    %c4_64 = arith.constant 4 : index
    %c0_65 = arith.constant 0 : index
    %68 = vector.load %arg10[%c4_64, %c0_65] : memref<16x32xf32, #tpu.memory_space<vmem>>, vector<2x32xf32>
    %cst_66 = arith.constant dense<0.000000e+00> : vector<2x32xf32>
    %69 = tpu.matmul %66, %50, %cst_66 {dimension_numbers = #tpu.dot_dimension_numbers<[1], [0], [0], [1], [0, 0, 1, 1], [], []>} : vector<2x32xf32>, vector<32x32xf32>, vector<2x32xf32> -> vector<2x32xf32>
    %70 = arith.addf %68, %69 : vector<2x32xf32>
    %71 = math.tanh %70 : vector<2x32xf32>
    %c0_67 = arith.constant 0 : index
    %c64 = arith.constant 64 : index
    %72 = vector.load %arg11[%c0_67, %c64] : memref<2x256xf32, #tpu.memory_space<vmem>>, vector<2x32xf32>
    tpu.vector_store %arg11[%c0_67, %c64], %71 {strides = array<i32>} : memref<2x256xf32, #tpu.memory_space<vmem>>, vector<2x32xf32>,
    %c6_68 = arith.constant 6 : index
    %c0_69 = arith.constant 0 : index
    %73 = vector.load %arg10[%c6_68, %c0_69] : memref<16x32xf32, #tpu.memory_space<vmem>>, vector<2x32xf32>
    %cst_70 = arith.constant dense<0.000000e+00> : vector<2x32xf32>
    %74 = tpu.matmul %71, %50, %cst_70 {dimension_numbers = #tpu.dot_dimension_numbers<[1], [0], [0], [1], [0, 0, 1, 1], [], []>} : vector<2x32xf32>, vector<32x32xf32>, vector<2x32xf32> -> vector<2x32xf32>
    %75 = arith.addf %73, %74 : vector<2x32xf32>
    %76 = math.tanh %75 : vector<2x32xf32>
    %c0_71 = arith.constant 0 : index
    %c96 = arith.constant 96 : index
    %77 = vector.load %arg11[%c0_71, %c96] : memref<2x256xf32, #tpu.memory_space<vmem>>, vector<2x32xf32>
    tpu.vector_store %arg11[%c0_71, %c96], %76 {strides = array<i32>} : memref<2x256xf32, #tpu.memory_space<vmem>>, vector<2x32xf32>,
    %c8_72 = arith.constant 8 : index
    %c0_73 = arith.constant 0 : index
    %78 = vector.load %arg10[%c8_72, %c0_73] : memref<16x32xf32, #tpu.memory_space<vmem>>, vector<2x32xf32>
    %cst_74 = arith.constant dense<0.000000e+00> : vector<2x32xf32>
    %79 = tpu.matmul %76, %50, %cst_74 {dimension_numbers = #tpu.dot_dimension_numbers<[1], [0], [0], [1], [0, 0, 1, 1], [], []>} : vector<2x32xf32>, vector<32x32xf32>, vector<2x32xf32> -> vector<2x32xf32>
    %80 = arith.addf %78, %79 : vector<2x32xf32>
    %81 = math.tanh %80 : vector<2x32xf32>
    %c0_75 = arith.constant 0 : index
    %c128 = arith.constant 128 : index
    %82 = vector.load %arg11[%c0_75, %c128] : memref<2x256xf32, #tpu.memory_space<vmem>>, vector<2x32xf32>
    tpu.vector_store %arg11[%c0_75, %c128], %81 {strides = array<i32>} : memref<2x256xf32, #tpu.memory_space<vmem>>, vector<2x32xf32>,
    %c10_76 = arith.constant 10 : index
    %c0_77 = arith.constant 0 : index
    %83 = vector.load %arg10[%c10_76, %c0_77] : memref<16x32xf32, #tpu.memory_space<vmem>>, vector<2x32xf32>
    %cst_78 = arith.constant dense<0.000000e+00> : vector<2x32xf32>
    %84 = tpu.matmul %81, %50, %cst_78 {dimension_numbers = #tpu.dot_dimension_numbers<[1], [0], [0], [1], [0, 0, 1, 1], [], []>} : vector<2x32xf32>, vector<32x32xf32>, vector<2x32xf32> -> vector<2x32xf32>
    %85 = arith.addf %83, %84 : vector<2x32xf32>
    %86 = math.tanh %85 : vector<2x32xf32>
    %c0_79 = arith.constant 0 : index
    %c160 = arith.constant 160 : index
    %87 = vector.load %arg11[%c0_79, %c160] : memref<2x256xf32, #tpu.memory_space<vmem>>, vector<2x32xf32>
    tpu.vector_store %arg11[%c0_79, %c160], %86 {strides = array<i32>} : memref<2x256xf32, #tpu.memory_space<vmem>>, vector<2x32xf32>,
    %c12_80 = arith.constant 12 : index
    %c0_81 = arith.constant 0 : index
    %88 = vector.load %arg10[%c12_80, %c0_81] : memref<16x32xf32, #tpu.memory_space<vmem>>, vector<2x32xf32>
    %cst_82 = arith.constant dense<0.000000e+00> : vector<2x32xf32>
    %89 = tpu.matmul %86, %50, %cst_82 {dimension_numbers = #tpu.dot_dimension_numbers<[1], [0], [0], [1], [0, 0, 1, 1], [], []>} : vector<2x32xf32>, vector<32x32xf32>, vector<2x32xf32> -> vector<2x32xf32>
    %90 = arith.addf %88, %89 : vector<2x32xf32>
    %91 = math.tanh %90 : vector<2x32xf32>
    %c0_83 = arith.constant 0 : index
    %c192 = arith.constant 192 : index
    %92 = vector.load %arg11[%c0_83, %c192] : memref<2x256xf32, #tpu.memory_space<vmem>>, vector<2x32xf32>
    tpu.vector_store %arg11[%c0_83, %c192], %91 {strides = array<i32>} : memref<2x256xf32, #tpu.memory_space<vmem>>, vector<2x32xf32>,
    %c14_84 = arith.constant 14 : index
    %c0_85 = arith.constant 0 : index
    %93 = vector.load %arg10[%c14_84, %c0_85] : memref<16x32xf32, #tpu.memory_space<vmem>>, vector<2x32xf32>
    %cst_86 = arith.constant dense<0.000000e+00> : vector<2x32xf32>
    %94 = tpu.matmul %91, %50, %cst_86 {dimension_numbers = #tpu.dot_dimension_numbers<[1], [0], [0], [1], [0, 0, 1, 1], [], []>} : vector<2x32xf32>, vector<32x32xf32>, vector<2x32xf32> -> vector<2x32xf32>
    %95 = arith.addf %93, %94 : vector<2x32xf32>
    %96 = math.tanh %95 : vector<2x32xf32>
    %c0_87 = arith.constant 0 : index
    %c224 = arith.constant 224 : index
    %97 = vector.load %arg11[%c0_87, %c224] : memref<2x256xf32, #tpu.memory_space<vmem>>, vector<2x32xf32>
    tpu.vector_store %arg11[%c0_87, %c224], %96 {strides = array<i32>} : memref<2x256xf32, #tpu.memory_space<vmem>>, vector<2x32xf32>,
    %c0_88 = arith.constant 0 : index
    %c0_89 = arith.constant 0 : index
    %98 = vector.load %arg11[%c0_88, %c0_89] : memref<2x256xf32, #tpu.memory_space<vmem>>, vector<2x256xf32>
    %c0_90 = arith.constant 0 : index
    %c0_91 = arith.constant 0 : index
    %99 = vector.load %arg7[%c0_90, %c0_91] : memref<256x10xf32, #tpu.memory_space<vmem>>, vector<256x10xf32>
    %cst_92 = arith.constant dense<0.000000e+00> : vector<2x10xf32>
    %100 = tpu.matmul %98, %99, %cst_92 {dimension_numbers = #tpu.dot_dimension_numbers<[1], [0], [0], [1], [0, 0, 1, 1], [], []>} : vector<2x256xf32>, vector<256x10xf32>, vector<2x10xf32> -> vector<2x10xf32>
    %c0_93 = arith.constant 0 : index
    %c0_94 = arith.constant 0 : index
    %101 = vector.load %arg8[%c0_93, %c0_94] : memref<1x10xf32, #tpu.memory_space<vmem>>, vector<1x10xf32>
    %102 = vector.broadcast %101 : vector<1x10xf32> to vector<2x10xf32>
    %103 = arith.addf %100, %102 : vector<2x10xf32>
    %c0_95 = arith.constant 0 : index
    %c0_96 = arith.constant 0 : index
    %104 = vector.load %arg9[%c0_95, %c0_96] : memref<2x10xf32, #tpu.memory_space<vmem>>, vector<2x10xf32>
    tpu.vector_store %arg9[%c0_95, %c0_96], %103 {strides = array<i32>} : memref<2x10xf32, #tpu.memory_space<vmem>>, vector<2x10xf32>,
    return
  }
}

</mosaic_0001>

<llo_original>
// kernel: tpu_custom_call.1
$region0: #{tpu_custom_call.1}
  #allocation0 [shape = 'u32[]', space=smem, size = 0x4, offset = 0x4, fixed_abs, tag = 'smem constant byte address 0x4 - core index']
  #allocation1 [shape = 'u32[144,128]{1,0:T(1,128)}', space=vmem, size = 0x12000, scoped, tag = 'internal scratch']
  #allocation2 [shape = 'f32[16,32]{1,0:T(8,128)}', space=vmem, size = 0x2000, scoped, tag = 'scratch operand']
  #allocation3 [shape = 'f32[2,256]{1,0:T(2,128)}', space=vmem, size = 0x800, scoped, tag = 'scratch operand']
  %s0 = inlined_call_operand.vmem [shape: f32[16,16], index: 0, kind: input, shape index: {}]
  %s1 = inlined_call_operand.vmem [shape: f32[16,32], index: 1, kind: input, shape index: {}]
  %s2 = inlined_call_operand.vmem [shape: f32[32,32], index: 2, kind: input, shape index: {}]
  %s3 = inlined_call_operand.vmem [shape: f32[1,32], index: 3, kind: input, shape index: {}]
  %s4 = inlined_call_operand.vmem [shape: f32[32,32], index: 4, kind: input, shape index: {}]
  %s5 = inlined_call_operand.vmem [shape: f32[32,32], index: 5, kind: input, shape index: {}]
  %s6 = inlined_call_operand.vmem [shape: f32[1,32], index: 6, kind: input, shape index: {}]
  %s7 = inlined_call_operand.vmem [shape: f32[256,10], index: 7, kind: input, shape index: {}]
  %s8 = inlined_call_operand.vmem [shape: f32[1,10], index: 8, kind: input, shape index: {}]
  %s9 = inlined_call_operand.hbm [shape: f32[2,10], index: 9, kind: output, shape index: {}]
  %s10 = sld [smem:[#allocation0]]
  $region46: #{tpu_custom_call.1} parent=0
    _
  %s12 = ssub.s32 1, %s10
  %s13 = scalar_select 0, %s12, %s10
  $region1: #{tpu_custom_call.1} parent=0
    #allocation4 [shape = 'u8[1024]{0}', space=vmem, size = 0x400, scoped, tag = 'output window, operand 0, single buffered']
    #allocation5 [shape = 's32[1]{0}', space=sflag, size = 0x4, scoped, tag = 'scoped memory for tpu_custom_call.1']
    %14 = vsyncpa [#allocation5], 0
    // Predicated region
    $region2: #{tpu_custom_call.1} parent=1 // pred_check
      _
    $region3: #{tpu_custom_call.1} parent=1 // pred_check_branch
      %16 = sbr.rel (0) target = $region5
    $region4: #{tpu_custom_call.1} parent=1 // pred_region
      _
    $region5: #{tpu_custom_call.1} parent=1 // pred_fallthru
      _
    // Predicated region
    $region6: #{tpu_custom_call.1} parent=1 // pred_check
      _
    $region7: #{tpu_custom_call.1} parent=1 // pred_check_branch
      %18 = sbr.rel (0) target = $region9
    $region8: #{tpu_custom_call.1} parent=1 // pred_region
      _
    $region9: #{tpu_custom_call.1} parent=1 // pred_fallthru
      _
    // Predicated region
    $region10: #{tpu_custom_call.1} parent=1 // pred_check
      _
    $region11: #{tpu_custom_call.1} parent=1 // pred_check_branch
      %20 = sbr.rel (0) target = $region13
    $region12: #{tpu_custom_call.1} parent=1 // pred_region
      _
    $region13: #{tpu_custom_call.1} parent=1 // pred_fallthru
      _
    // Predicated region
    $region14: #{tpu_custom_call.1} parent=1 // pred_check
      _
    $region15: #{tpu_custom_call.1} parent=1 // pred_check_branch
      %22 = sbr.rel (0) target = $region17
    $region16: #{tpu_custom_call.1} parent=1 // pred_region
      _
    $region17: #{tpu_custom_call.1} parent=1 // pred_fallthru
      _
    // Predicated region
    $region18: #{tpu_custom_call.1} parent=1 // pred_check
      _
    $region19: #{tpu_custom_call.1} parent=1 // pred_check_branch
      %24 = sbr.rel (0) target = $region21
    $region20: #{tpu_custom_call.1} parent=1 // pred_region
      _
    $region21: #{tpu_custom_call.1} parent=1 // pred_fallthru
      _
    // Predicated region
    $region22: #{tpu_custom_call.1} parent=1 // pred_check
      _
    $region23: #{tpu_custom_call.1} parent=1 // pred_check_branch
      %26 = sbr.rel (0) target = $region25
    $region24: #{tpu_custom_call.1} parent=1 // pred_region
      _
    $region25: #{tpu_custom_call.1} parent=1 // pred_fallthru
      _
    // Predicated region
    $region26: #{tpu_custom_call.1} parent=1 // pred_check
      _
    $region27: #{tpu_custom_call.1} parent=1 // pred_check_branch
      %28 = sbr.rel (0) target = $region29
    $region28: #{tpu_custom_call.1} parent=1 // pred_region
      _
    $region29: #{tpu_custom_call.1} parent=1 // pred_fallthru
      _
    // Predicated region
    $region30: #{tpu_custom_call.1} parent=1 // pred_check
      _
    $region31: #{tpu_custom_call.1} parent=1 // pred_check_branch
      %30 = sbr.rel (0) target = $region33
    $region32: #{tpu_custom_call.1} parent=1 // pred_region
      _
    $region33: #{tpu_custom_call.1} parent=1 // pred_fallthru
      _
    // Predicated region
    $region34: #{tpu_custom_call.1} parent=1 // pred_check
      _
    $region35: #{tpu_custom_call.1} parent=1 // pred_check_branch
      %32 = sbr.rel (0) target = $region37
    $region36: #{tpu_custom_call.1} parent=1 // pred_region
      _
    $region37: #{tpu_custom_call.1} parent=1 // pred_fallthru
      _
    %v33 = vld [vmem:[%s1] sm:$0xff]
    %v34 = vld [vmem:[%s1 + $0x8] sm:$0xff]
    %v35 = vld [vmem:[%s2] sm:$0xff]
    %v36 = vld [vmem:[%s2 + $0x8] sm:$0xff]
    %v37 = vld [vmem:[%s2 + $0x10] sm:$0xff]
    %v38 = vld [vmem:[%s2 + $0x18] sm:$0xff]
    %v39 = vld [vmem:[%s3] sm:$0x1]
    %v40 = vld [vmem:[%s0] sm:$0xff]
    %v41 = vld [vmem:[%s0 + $0x8] sm:$0xff]
    %v43 = vlaneseq
    %v44 = vshrl.u32 %v43, 7
    %v45 = vsub.s32 0, %v44
    %v46 = vrot.slane %v39, %v45
    %vm48 = vcmask 130048
    %v50 = vsel %vm48, %v40, 0
    %v53 = vsel %vm48, %v41, 0
    %55 = vmatprep.subr.mxu0 0.0
    %56 = vmatpush1.msra.mxu0 %v33
    %57 = vmatprep.subr.mxu0 0.0
    %58 = vmatpush1.msra.mxu0 %v34
    %59 = vmatprep.subr.mxu0 0.0
    %60 = vmatpush1.msra.mxu0 0.0
    %61 = vmatprep.subr.mxu0 0.0
    %62 = vmatpush1.msra.mxu0 0.0
    %63 = vmatprep.subr.mxu0 0.0
    %64 = vmatpush1.msra.mxu0 0.0
    %65 = vmatprep.subr.mxu0 0.0
    %66 = vmatpush1.msra.mxu0 0.0
    %67 = vmatprep.subr.mxu0 0.0
    %68 = vmatpush1.msra.mxu0 0.0
    %69 = vmatprep.subr.mxu0 0.0
    %70 = vmatpush1.msra.mxu0 0.0
    %71 = vmatprep.subr.mxu0 0.0
    %72 = vmatpush1.msra.mxu0 0.0
    %73 = vmatprep.subr.mxu0 0.0
    %74 = vmatpush1.msra.mxu0 0.0
    %75 = vmatprep.subr.mxu0 0.0
    %76 = vmatpush1.msra.mxu0 0.0
    %77 = vmatprep.subr.mxu0 0.0
    %78 = vmatpush1.msra.mxu0 0.0
    %79 = vmatprep.subr.mxu0 0.0
    %80 = vmatpush1.msra.mxu0 0.0
    %81 = vmatprep.subr.mxu0 0.0
    %82 = vmatpush1.msra.mxu0 0.0
    %83 = vmatprep.subr.mxu0 0.0
    %84 = vmatpush1.msra.mxu0 0.0
    %85 = vmatprep.subr.mxu0 0.0
    %86 = vmatpush1.msra.mxu0 0.0
    %87 = vmatprep.subr.mxu0 0.0
    %88 = vmatpush1.msra.mxu0 0.0
    %89 = vmatprep.subr.mxu0 0.0
    %90 = vmatpush1.msra.mxu0 0.0
    %91 = vmatprep.subr.mxu0 0.0
    %92 = vmatpush1.msra.mxu0 0.0
    %93 = vmatprep.subr.mxu0 0.0
    %94 = vmatpush1.msra.mxu0 0.0
    %95 = vmatprep.subr.mxu0 0.0
    %96 = vmatpush1.msra.mxu0 0.0
    %97 = vmatprep.subr.mxu0 0.0
    %98 = vmatpush1.msra.mxu0 0.0
    %99 = vmatprep.subr.mxu0 0.0
    %100 = vmatpush1.msra.mxu0 0.0
    %101 = vmatprep.subr.mxu0 0.0
    %102 = vmatpush1.msra.mxu0 0.0
    %103 = vmatprep.subr.mxu0 0.0
    %104 = vmatpush1.msra.mxu0 0.0
    %105 = vmatprep.subr.mxu0 0.0
    %106 = vmatpush1.msra.mxu0 0.0
    %107 = vmatprep.subr.mxu0 0.0
    %108 = vmatpush1.msra.mxu0 0.0
    %109 = vmatprep.subr.mxu0 0.0
    %110 = vmatpush1.msra.mxu0 0.0
    %111 = vmatprep.subr.mxu0 0.0
    %112 = vmatpush1.msra.mxu0 0.0
    %113 = vmatprep.subr.mxu0 0.0
    %114 = vmatpush1.msra.mxu0 0.0
    %115 = vmatprep.subr.mxu0 0.0
    %116 = vmatpush1.msra.mxu0 0.0
    %117 = vmatprep.subr.mxu0 0.0
    %118 = vmatpush1.msra.mxu0 0.0
    %119 = vmatprep.mubr.f32.mxu0 0.0
    %120 = vmatmul.mubr.f32.gmra.mrb[0].mxu0 %v50
    %v121 = vpop.f32.mrb[0].mxu0
    %v122 = vadd.f32 %v46, %v121
    %v123 = vpop.f32.mrb[0].mxu0
    %124 = vmatprep.mubr.f32.mxu0 0.0
    %125 = vmatmul.mubr.f32.gmra.mrb[0].mxu0 %v53
    %v126 = vpop.f32.mrb[0].mxu0
    %v127 = vadd.f32 %v46, %v126
    %v128 = vpop.f32.mrb[0].mxu0
    %129 = vdwg.mxu0
    %vm130 = vcmask 261120
    %131 = vst.msk [vmem:[#allocation2] sm:$0xff] %vm130, %v122
    %132 = vst.msk [vmem:[#allocation2 + $0x8] sm:$0xff] %vm130, %v127
    %v133 = vld [vmem:[#allocation2] sm:$0x3]
    %v135 = vsel %vm130, 0.0, 0
    %137 = vmatprep.subr.mxu0 0.0
    %138 = vmatpush1.msra.mxu0 %v35
    %139 = vmatprep.subr.mxu0 0.0
    %140 = vmatpush1.msra.mxu0 %v36
    %141 = vmatprep.subr.mxu0 0.0
    %142 = vmatpush1.msra.mxu0 %v37
    %143 = vmatprep.subr.mxu0 0.0
    %144 = vmatpush1.msra.mxu0 %v38
    %145 = vmatprep.subr.mxu0 0.0
    %146 = vmatpush1.msra.mxu0 0.0
    %147 = vmatprep.subr.mxu0 0.0
    %148 = vmatpush1.msra.mxu0 0.0
    %149 = vmatprep.subr.mxu0 0.0
    %150 = vmatpush1.msra.mxu0 0.0
    %151 = vmatprep.subr.mxu0 0.0
    %152 = vmatpush1.msra.mxu0 0.0
    %153 = vmatprep.subr.mxu0 0.0
    %154 = vmatpush1.msra.mxu0 0.0
    %155 = vmatprep.subr.mxu0 0.0
    %156 = vmatpush1.msra.mxu0 0.0
    %157 = vmatprep.subr.mxu0 0.0
    %158 = vmatpush1.msra.mxu0 0.0
    %159 = vmatprep.subr.mxu0 0.0
    %160 = vmatpush1.msra.mxu0 0.0
    %161 = vmatprep.subr.mxu0 0.0
    %162 = vmatpush1.msra.mxu0 0.0
    %163 = vmatprep.subr.mxu0 0.0
    %164 = vmatpush1.msra.mxu0 0.0
    %165 = vmatprep.subr.mxu0 0.0
    %166 = vmatpush1.msra.mxu0 0.0
    %167 = vmatprep.subr.mxu0 0.0
    %168 = vmatpush1.msra.mxu0 0.0
    %169 = vmatprep.subr.mxu0 0.0
    %170 = vmatpush1.msra.mxu0 0.0
    %171 = vmatprep.subr.mxu0 0.0
    %172 = vmatpush1.msra.mxu0 0.0
    %173 = vmatprep.subr.mxu0 0.0
    %174 = vmatpush1.msra.mxu0 0.0
    %175 = vmatprep.subr.mxu0 0.0
    %176 = vmatpush1.msra.mxu0 0.0
    %177 = vmatprep.subr.mxu0 0.0
    %178 = vmatpush1.msra.mxu0 0.0
    %179 = vmatprep.subr.mxu0 0.0
    %180 = vmatpush1.msra.mxu0 0.0
    %181 = vmatprep.subr.mxu0 0.0
    %182 = vmatpush1.msra.mxu0 0.0
    %183 = vmatprep.subr.mxu0 0.0
    %184 = vmatpush1.msra.mxu0 0.0
    %185 = vmatprep.subr.mxu0 0.0
    %186 = vmatpush1.msra.mxu0 0.0
    %187 = vmatprep.subr.mxu0 0.0
    %188 = vmatpush1.msra.mxu0 0.0
    %189 = vmatprep.subr.mxu0 0.0
    %190 = vmatpush1.msra.mxu0 0.0
    %191 = vmatprep.subr.mxu0 0.0
    %192 = vmatpush1.msra.mxu0 0.0
    %193 = vmatprep.subr.mxu0 0.0
    %194 = vmatpush1.msra.mxu0 0.0
    %195 = vmatprep.subr.mxu0 0.0
    %196 = vmatpush1.msra.mxu0 0.0
    %197 = vmatprep.subr.mxu0 0.0
    %198 = vmatpush1.msra.mxu0 0.0
    %199 = vmatprep.subr.mxu0 0.0
    %200 = vmatpush1.msra.mxu0 0.0
    %201 = vmatprep.mubr.f32.mxu0 0.0
    %202 = vmatmul.mubr.f32.gmra.mrb[0].mxu0 %v135
    %v203 = vpop.f32.mrb[0].mxu0
    %v204 = vadd.f32 0.0, %v203
    %v205 = vpop.f32.mrb[0].mxu0
    %206 = vdwg.mxu0
    %v207 = vadd.f32 %v133, %v204
    %v208 = vtanh.pop %v207
    %vm209 = vcmask 254976
    %210 = vst.msk [vmem:[#allocation2] sm:$0x3] %vm209, %v208
    %v211 = vld [vmem:[#allocation2 + $0x2] sm:$0x3]
    %v213 = vsel %vm130, %v208, 0
    %215 = vmatprep.subr.mxu0 0.0
    %216 = vmatpush1.msra.mxu0 %v35
    %217 = vmatprep.subr.mxu0 0.0
    %218 = vmatpush1.msra.mxu0 %v36
    %219 = vmatprep.subr.mxu0 0.0
    %220 = vmatpush1.msra.mxu0 %v37
    %221 = vmatprep.subr.mxu0 0.0
    %222 = vmatpush1.msra.mxu0 %v38
    %223 = vmatprep.subr.mxu0 0.0
    %224 = vmatpush1.msra.mxu0 0.0
    %225 = vmatprep.subr.mxu0 0.0
    %226 = vmatpush1.msra.mxu0 0.0
    %227 = vmatprep.subr.mxu0 0.0
    %228 = vmatpush1.msra.mxu0 0.0
    %229 = vmatprep.subr.mxu0 0.0
    %230 = vmatpush1.msra.mxu0 0.0
    %231 = vmatprep.subr.mxu0 0.0
    %232 = vmatpush1.msra.mxu0 0.0
    %233 = vmatprep.subr.mxu0 0.0
    %234 = vmatpush1.msra.mxu0 0.0
    %235 = vmatprep.subr.mxu0 0.0
    %236 = vmatpush1.msra.mxu0 0.0
    %237 = vmatprep.subr.mxu0 0.0
    %238 = vmatpush1.msra.mxu0 0.0
    %239 = vmatprep.subr.mxu0 0.0
    %240 = vmatpush1.msra.mxu0 0.0
    %241 = vmatprep.subr.mxu0 0.0
    %242 = vmatpush1.msra.mxu0 0.0
    %243 = vmatprep.subr.mxu0 0.0
    %244 = vmatpush1.msra.mxu0 0.0
    %245 = vmatprep.subr.mxu0 0.0
    %246 = vmatpush1.msra.mxu0 0.0
    %247 = vmatprep.subr.mxu0 0.0
    %248 = vmatpush1.msra.mxu0 0.0
    %249 = vmatprep.subr.mxu0 0.0
    %250 = vmatpush1.msra.mxu0 0.0
    %251 = vmatprep.subr.mxu0 0.0
    %252 = vmatpush1.msra.mxu0 0.0
    %253 = vmatprep.subr.mxu0 0.0
    %254 = vmatpush1.msra.mxu0 0.0
    %255 = vmatprep.subr.mxu0 0.0
    %256 = vmatpush1.msra.mxu0 0.0
    %257 = vmatprep.subr.mxu0 0.0
    %258 = vmatpush1.msra.mxu0 0.0
    %259 = vmatprep.subr.mxu0 0.0
    %260 = vmatpush1.msra.mxu0 0.0
    %261 = vmatprep.subr.mxu0 0.0
    %262 = vmatpush1.msra.mxu0 0.0
    %263 = vmatprep.subr.mxu0 0.0
    %264 = vmatpush1.msra.mxu0 0.0
    %265 = vmatprep.subr.mxu0 0.0
    %266 = vmatpush1.msra.mxu0 0.0
    %267 = vmatprep.subr.mxu0 0.0
    %268 = vmatpush1.msra.mxu0 0.0
    %269 = vmatprep.subr.mxu0 0.0
    %270 = vmatpush1.msra.mxu0 0.0
    %271 = vmatprep.subr.mxu0 0.0
    %272 = vmatpush1.msra.mxu0 0.0
    %273 = vmatprep.subr.mxu0 0.0
    %274 = vmatpush1.msra.mxu0 0.0
    %275 = vmatprep.subr.mxu0 0.0
    %276 = vmatpush1.msra.mxu0 0.0
    %277 = vmatprep.subr.mxu0 0.0
    %278 = vmatpush1.msra.mxu0 0.0
    %279 = vmatprep.mubr.f32.mxu0 0.0
    %280 = vmatmul.mubr.f32.gmra.mrb[0].mxu0 %v213
    %v281 = vpop.f32.mrb[0].mxu0
    %v282 = vadd.f32 0.0, %v281
    %v283 = vpop.f32.mrb[0].mxu0
    %284 = vdwg.mxu0
    %v285 = vadd.f32 %v211, %v282
    %v286 = vtanh.pop %v285
    %287 = vst.msk [vmem:[#allocation2 + $0x2] sm:$0x3] %vm209, %v286
    %v288 = vld [vmem:[#allocation2 + $0x4] sm:$0x3]
    %v290 = vsel %vm130, %v286, 0
    %292 = vmatprep.subr.mxu0 0.0
    %293 = vmatpush1.msra.mxu0 %v35
    %294 = vmatprep.subr.mxu0 0.0
    %295 = vmatpush1.msra.mxu0 %v36
    %296 = vmatprep.subr.mxu0 0.0
    %297 = vmatpush1.msra.mxu0 %v37
    %298 = vmatprep.subr.mxu0 0.0
    %299 = vmatpush1.msra.mxu0 %v38
    %300 = vmatprep.subr.mxu0 0.0
    %301 = vmatpush1.msra.mxu0 0.0
    %302 = vmatprep.subr.mxu0 0.0
    %303 = vmatpush1.msra.mxu0 0.0
    %304 = vmatprep.subr.mxu0 0.0
    %305 = vmatpush1.msra.mxu0 0.0
    %306 = vmatprep.subr.mxu0 0.0
    %307 = vmatpush1.msra.mxu0 0.0
    %308 = vmatprep.subr.mxu0 0.0
    %309 = vmatpush1.msra.mxu0 0.0
    %310 = vmatprep.subr.mxu0 0.0
    %311 = vmatpush1.msra.mxu0 0.0
    %312 = vmatprep.subr.mxu0 0.0
    %313 = vmatpush1.msra.mxu0 0.0
    %314 = vmatprep.subr.mxu0 0.0
    %315 = vmatpush1.msra.mxu0 0.0
    %316 = vmatprep.subr.mxu0 0.0
    %317 = vmatpush1.msra.mxu0 0.0
    %318 = vmatprep.subr.mxu0 0.0
    %319 = vmatpush1.msra.mxu0 0.0
    %320 = vmatprep.subr.mxu0 0.0
    %321 = vmatpush1.msra.mxu0 0.0
    %322 = vmatprep.subr.mxu0 0.0
    %323 = vmatpush1.msra.mxu0 0.0
    %324 = vmatprep.subr.mxu0 0.0
    %325 = vmatpush1.msra.mxu0 0.0
    %326 = vmatprep.subr.mxu0 0.0
    %327 = vmatpush1.msra.mxu0 0.0
    %328 = vmatprep.subr.mxu0 0.0
    %329 = vmatpush1.msra.mxu0 0.0
    %330 = vmatprep.subr.mxu0 0.0
    %331 = vmatpush1.msra.mxu0 0.0
    %332 = vmatprep.subr.mxu0 0.0
    %333 = vmatpush1.msra.mxu0 0.0
    %334 = vmatprep.subr.mxu0 0.0
    %335 = vmatpush1.msra.mxu0 0.0
    %336 = vmatprep.subr.mxu0 0.0
    %337 = vmatpush1.msra.mxu0 0.0
    %338 = vmatprep.subr.mxu0 0.0
    %339 = vmatpush1.msra.mxu0 0.0
    %340 = vmatprep.subr.mxu0 0.0
    %341 = vmatpush1.msra.mxu0 0.0
    %342 = vmatprep.subr.mxu0 0.0
    %343 = vmatpush1.msra.mxu0 0.0
    %344 = vmatprep.subr.mxu0 0.0
    %345 = vmatpush1.msra.mxu0 0.0
    %346 = vmatprep.subr.mxu0 0.0
    %347 = vmatpush1.msra.mxu0 0.0
    %348 = vmatprep.subr.mxu0 0.0
    %349 = vmatpush1.msra.mxu0 0.0
    %350 = vmatprep.subr.mxu0 0.0
    %351 = vmatpush1.msra.mxu0 0.0
    %352 = vmatprep.subr.mxu0 0.0
    %353 = vmatpush1.msra.mxu0 0.0
    %354 = vmatprep.subr.mxu0 0.0
    %355 = vmatpush1.msra.mxu0 0.0
    %356 = vmatprep.mubr.f32.mxu0 0.0
    %357 = vmatmul.mubr.f32.gmra.mrb[0].mxu0 %v290
    %v358 = vpop.f32.mrb[0].mxu0
    %v359 = vadd.f32 0.0, %v358
    %v360 = vpop.f32.mrb[0].mxu0
    %361 = vdwg.mxu0
    %v362 = vadd.f32 %v288, %v359
    %v363 = vtanh.pop %v362
    %364 = vst.msk [vmem:[#allocation2 + $0x4] sm:$0x3] %vm209, %v363
    %v365 = vld [vmem:[#allocation2 + $0x6] sm:$0x3]
    %v367 = vsel %vm130, %v363, 0
    %369 = vmatprep.subr.mxu0 0.0
    %370 = vmatpush1.msra.mxu0 %v35
    %371 = vmatprep.subr.mxu0 0.0
    %372 = vmatpush1.msra.mxu0 %v36
    %373 = vmatprep.subr.mxu0 0.0
    %374 = vmatpush1.msra.mxu0 %v37
    %375 = vmatprep.subr.mxu0 0.0
    %376 = vmatpush1.msra.mxu0 %v38
    %377 = vmatprep.subr.mxu0 0.0
    %378 = vmatpush1.msra.mxu0 0.0
    %379 = vmatprep.subr.mxu0 0.0
    %380 = vmatpush1.msra.mxu0 0.0
    %381 = vmatprep.subr.mxu0 0.0
    %382 = vmatpush1.msra.mxu0 0.0
    %383 = vmatprep.subr.mxu0 0.0
    %384 = vmatpush1.msra.mxu0 0.0
    %385 = vmatprep.subr.mxu0 0.0
    %386 = vmatpush1.msra.mxu0 0.0
    %387 = vmatprep.subr.mxu0 0.0
    %388 = vmatpush1.msra.mxu0 0.0
    %389 = vmatprep.subr.mxu0 0.0
    %390 = vmatpush1.msra.mxu0 0.0
    %391 = vmatprep.subr.mxu0 0.0
    %392 = vmatpush1.msra.mxu0 0.0
    %393 = vmatprep.subr.mxu0 0.0
    %394 = vmatpush1.msra.mxu0 0.0
    %395 = vmatprep.subr.mxu0 0.0
    %396 = vmatpush1.msra.mxu0 0.0
    %397 = vmatprep.subr.mxu0 0.0
    %398 = vmatpush1.msra.mxu0 0.0
    %399 = vmatprep.subr.mxu0 0.0
    %400 = vmatpush1.msra.mxu0 0.0
    %401 = vmatprep.subr.mxu0 0.0
    %402 = vmatpush1.msra.mxu0 0.0
    %403 = vmatprep.subr.mxu0 0.0
    %404 = vmatpush1.msra.mxu0 0.0
    %405 = vmatprep.subr.mxu0 0.0
    %406 = vmatpush1.msra.mxu0 0.0
    %407 = vmatprep.subr.mxu0 0.0
    %408 = vmatpush1.msra.mxu0 0.0
    %409 = vmatprep.subr.mxu0 0.0
    %410 = vmatpush1.msra.mxu0 0.0
    %411 = vmatprep.subr.mxu0 0.0
    %412 = vmatpush1.msra.mxu0 0.0
    %413 = vmatprep.subr.mxu0 0.0
    %414 = vmatpush1.msra.mxu0 0.0
    %415 = vmatprep.subr.mxu0 0.0
    %416 = vmatpush1.msra.mxu0 0.0
    %417 = vmatprep.subr.mxu0 0.0
    %418 = vmatpush1.msra.mxu0 0.0
    %419 = vmatprep.subr.mxu0 0.0
    %420 = vmatpush1.msra.mxu0 0.0
    %421 = vmatprep.subr.mxu0 0.0
    %422 = vmatpush1.msra.mxu0 0.0
    %423 = vmatprep.subr.mxu0 0.0
    %424 = vmatpush1.msra.mxu0 0.0
    %425 = vmatprep.subr.mxu0 0.0
    %426 = vmatpush1.msra.mxu0 0.0
    %427 = vmatprep.subr.mxu0 0.0
    %428 = vmatpush1.msra.mxu0 0.0
    %429 = vmatprep.subr.mxu0 0.0
    %430 = vmatpush1.msra.mxu0 0.0
    %431 = vmatprep.subr.mxu0 0.0
    %432 = vmatpush1.msra.mxu0 0.0
    %433 = vmatprep.mubr.f32.mxu0 0.0
    %434 = vmatmul.mubr.f32.gmra.mrb[0].mxu0 %v367
    %v435 = vpop.f32.mrb[0].mxu0
    %v436 = vadd.f32 0.0, %v435
    %v437 = vpop.f32.mrb[0].mxu0
    %438 = vdwg.mxu0
    %v439 = vadd.f32 %v365, %v436
    %v440 = vtanh.pop %v439
    %441 = vst.msk [vmem:[#allocation2 + $0x6] sm:$0x3] %vm209, %v440
    %v442 = vld [vmem:[#allocation2 + $0x8] sm:$0x3]
    %v444 = vsel %vm130, %v440, 0
    %446 = vmatprep.subr.mxu0 0.0
    %447 = vmatpush1.msra.mxu0 %v35
    %448 = vmatprep.subr.mxu0 0.0
    %449 = vmatpush1.msra.mxu0 %v36
    %450 = vmatprep.subr.mxu0 0.0
    %451 = vmatpush1.msra.mxu0 %v37
    %452 = vmatprep.subr.mxu0 0.0
    %453 = vmatpush1.msra.mxu0 %v38
    %454 = vmatprep.subr.mxu0 0.0
    %455 = vmatpush1.msra.mxu0 0.0
    %456 = vmatprep.subr.mxu0 0.0
    %457 = vmatpush1.msra.mxu0 0.0
    %458 = vmatprep.subr.mxu0 0.0
    %459 = vmatpush1.msra.mxu0 0.0
    %460 = vmatprep.subr.mxu0 0.0
    %461 = vmatpush1.msra.mxu0 0.0
    %462 = vmatprep.subr.mxu0 0.0
    %463 = vmatpush1.msra.mxu0 0.0
    %464 = vmatprep.subr.mxu0 0.0
    %465 = vmatpush1.msra.mxu0 0.0
    %466 = vmatprep.subr.mxu0 0.0
    %467 = vmatpush1.msra.mxu0 0.0
    %468 = vmatprep.subr.mxu0 0.0
    %469 = vmatpush1.msra.mxu0 0.0
    %470 = vmatprep.subr.mxu0 0.0
    %471 = vmatpush1.msra.mxu0 0.0
    %472 = vmatprep.subr.mxu0 0.0
    %473 = vmatpush1.msra.mxu0 0.0
    %474 = vmatprep.subr.mxu0 0.0
    %475 = vmatpush1.msra.mxu0 0.0
    %476 = vmatprep.subr.mxu0 0.0
    %477 = vmatpush1.msra.mxu0 0.0
    %478 = vmatprep.subr.mxu0 0.0
    %479 = vmatpush1.msra.mxu0 0.0
    %480 = vmatprep.subr.mxu0 0.0
    %481 = vmatpush1.msra.mxu0 0.0
    %482 = vmatprep.subr.mxu0 0.0
    %483 = vmatpush1.msra.mxu0 0.0
    %484 = vmatprep.subr.mxu0 0.0
    %485 = vmatpush1.msra.mxu0 0.0
    %486 = vmatprep.subr.mxu0 0.0
    %487 = vmatpush1.msra.mxu0 0.0
    %488 = vmatprep.subr.mxu0 0.0
    %489 = vmatpush1.msra.mxu0 0.0
    %490 = vmatprep.subr.mxu0 0.0
    %491 = vmatpush1.msra.mxu0 0.0
    %492 = vmatprep.subr.mxu0 0.0
    %493 = vmatpush1.msra.mxu0 0.0
    %494 = vmatprep.subr.mxu0 0.0
    %495 = vmatpush1.msra.mxu0 0.0
    %496 = vmatprep.subr.mxu0 0.0
    %497 = vmatpush1.msra.mxu0 0.0
    %498 = vmatprep.subr.mxu0 0.0
    %499 = vmatpush1.msra.mxu0 0.0
    %500 = vmatprep.subr.mxu0 0.0
    %501 = vmatpush1.msra.mxu0 0.0
    %502 = vmatprep.subr.mxu0 0.0
    %503 = vmatpush1.msra.mxu0 0.0
    %504 = vmatprep.subr.mxu0 0.0
    %505 = vmatpush1.msra.mxu0 0.0
    %506 = vmatprep.subr.mxu0 0.0
    %507 = vmatpush1.msra.mxu0 0.0
    %508 = vmatprep.subr.mxu0 0.0
    %509 = vmatpush1.msra.mxu0 0.0
    %510 = vmatprep.mubr.f32.mxu0 0.0
    %511 = vmatmul.mubr.f32.gmra.mrb[0].mxu0 %v444
    %v512 = vpop.f32.mrb[0].mxu0
    %v513 = vadd.f32 0.0, %v512
    %v514 = vpop.f32.mrb[0].mxu0
    %515 = vdwg.mxu0
    %v516 = vadd.f32 %v442, %v513
    %v517 = vtanh.pop %v516
    %518 = vst.msk [vmem:[#allocation2 + $0x8] sm:$0x3] %vm209, %v517
    %v519 = vld [vmem:[#allocation2 + $0xa] sm:$0x3]
    %v521 = vsel %vm130, %v517, 0
    %523 = vmatprep.subr.mxu0 0.0
    %524 = vmatpush1.msra.mxu0 %v35
    %525 = vmatprep.subr.mxu0 0.0
    %526 = vmatpush1.msra.mxu0 %v36
    %527 = vmatprep.subr.mxu0 0.0
    %528 = vmatpush1.msra.mxu0 %v37
    %529 = vmatprep.subr.mxu0 0.0
    %530 = vmatpush1.msra.mxu0 %v38
    %531 = vmatprep.subr.mxu0 0.0
    %532 = vmatpush1.msra.mxu0 0.0
    %533 = vmatprep.subr.mxu0 0.0
    %534 = vmatpush1.msra.mxu0 0.0
    %535 = vmatprep.subr.mxu0 0.0
    %536 = vmatpush1.msra.mxu0 0.0
    %537 = vmatprep.subr.mxu0 0.0
    %538 = vmatpush1.msra.mxu0 0.0
    %539 = vmatprep.subr.mxu0 0.0
    %540 = vmatpush1.msra.mxu0 0.0
    %541 = vmatprep.subr.mxu0 0.0
    %542 = vmatpush1.msra.mxu0 0.0
    %543 = vmatprep.subr.mxu0 0.0
    %544 = vmatpush1.msra.mxu0 0.0
    %545 = vmatprep.subr.mxu0 0.0
    %546 = vmatpush1.msra.mxu0 0.0
    %547 = vmatprep.subr.mxu0 0.0
    %548 = vmatpush1.msra.mxu0 0.0
    %549 = vmatprep.subr.mxu0 0.0
    %550 = vmatpush1.msra.mxu0 0.0
    %551 = vmatprep.subr.mxu0 0.0
    %552 = vmatpush1.msra.mxu0 0.0
    %553 = vmatprep.subr.mxu0 0.0
    %554 = vmatpush1.msra.mxu0 0.0
    %555 = vmatprep.subr.mxu0 0.0
    %556 = vmatpush1.msra.mxu0 0.0
    %557 = vmatprep.subr.mxu0 0.0
    %558 = vmatpush1.msra.mxu0 0.0
    %559 = vmatprep.subr.mxu0 0.0
    %560 = vmatpush1.msra.mxu0 0.0
    %561 = vmatprep.subr.mxu0 0.0
    %562 = vmatpush1.msra.mxu0 0.0
    %563 = vmatprep.subr.mxu0 0.0
    %564 = vmatpush1.msra.mxu0 0.0
    %565 = vmatprep.subr.mxu0 0.0
    %566 = vmatpush1.msra.mxu0 0.0
    %567 = vmatprep.subr.mxu0 0.0
    %568 = vmatpush1.msra.mxu0 0.0
    %569 = vmatprep.subr.mxu0 0.0
    %570 = vmatpush1.msra.mxu0 0.0
    %571 = vmatprep.subr.mxu0 0.0
    %572 = vmatpush1.msra.mxu0 0.0
    %573 = vmatprep.subr.mxu0 0.0
    %574 = vmatpush1.msra.mxu0 0.0
    %575 = vmatprep.subr.mxu0 0.0
    %576 = vmatpush1.msra.mxu0 0.0
    %577 = vmatprep.subr.mxu0 0.0
    %578 = vmatpush1.msra.mxu0 0.0
    %579 = vmatprep.subr.mxu0 0.0
    %580 = vmatpush1.msra.mxu0 0.0
    %581 = vmatprep.subr.mxu0 0.0
    %582 = vmatpush1.msra.mxu0 0.0
    %583 = vmatprep.subr.mxu0 0.0
    %584 = vmatpush1.msra.mxu0 0.0
    %585 = vmatprep.subr.mxu0 0.0
    %586 = vmatpush1.msra.mxu0 0.0
    %587 = vmatprep.mubr.f32.mxu0 0.0
    %588 = vmatmul.mubr.f32.gmra.mrb[0].mxu0 %v521
    %v589 = vpop.f32.mrb[0].mxu0
    %v590 = vadd.f32 0.0, %v589
    %v591 = vpop.f32.mrb[0].mxu0
    %592 = vdwg.mxu0
    %v593 = vadd.f32 %v519, %v590
    %v594 = vtanh.pop %v593
    %595 = vst.msk [vmem:[#allocation2 + $0xa] sm:$0x3] %vm209, %v594
    %v596 = vld [vmem:[#allocation2 + $0xc] sm:$0x3]
    %v598 = vsel %vm130, %v594, 0
    %600 = vmatprep.subr.mxu0 0.0
    %601 = vmatpush1.msra.mxu0 %v35
    %602 = vmatprep.subr.mxu0 0.0
    %603 = vmatpush1.msra.mxu0 %v36
    %604 = vmatprep.subr.mxu0 0.0
    %605 = vmatpush1.msra.mxu0 %v37
    %606 = vmatprep.subr.mxu0 0.0
    %607 = vmatpush1.msra.mxu0 %v38
    %608 = vmatprep.subr.mxu0 0.0
    %609 = vmatpush1.msra.mxu0 0.0
    %610 = vmatprep.subr.mxu0 0.0
    %611 = vmatpush1.msra.mxu0 0.0
    %612 = vmatprep.subr.mxu0 0.0
    %613 = vmatpush1.msra.mxu0 0.0
    %614 = vmatprep.subr.mxu0 0.0
    %615 = vmatpush1.msra.mxu0 0.0
    %616 = vmatprep.subr.mxu0 0.0
    %617 = vmatpush1.msra.mxu0 0.0
    %618 = vmatprep.subr.mxu0 0.0
    %619 = vmatpush1.msra.mxu0 0.0
    %620 = vmatprep.subr.mxu0 0.0
    %621 = vmatpush1.msra.mxu0 0.0
    %622 = vmatprep.subr.mxu0 0.0
    %623 = vmatpush1.msra.mxu0 0.0
    %624 = vmatprep.subr.mxu0 0.0
    %625 = vmatpush1.msra.mxu0 0.0
    %626 = vmatprep.subr.mxu0 0.0
    %627 = vmatpush1.msra.mxu0 0.0
    %628 = vmatprep.subr.mxu0 0.0
    %629 = vmatpush1.msra.mxu0 0.0
    %630 = vmatprep.subr.mxu0 0.0
    %631 = vmatpush1.msra.mxu0 0.0
    %632 = vmatprep.subr.mxu0 0.0
    %633 = vmatpush1.msra.mxu0 0.0
    %634 = vmatprep.subr.mxu0 0.0
    %635 = vmatpush1.msra.mxu0 0.0
    %636 = vmatprep.subr.mxu0 0.0
    %637 = vmatpush1.msra.mxu0 0.0
    %638 = vmatprep.subr.mxu0 0.0
    %639 = vmatpush1.msra.mxu0 0.0
    %640 = vmatprep.subr.mxu0 0.0
    %641 = vmatpush1.msra.mxu0 0.0
    %642 = vmatprep.subr.mxu0 0.0
    %643 = vmatpush1.msra.mxu0 0.0
    %644 = vmatprep.subr.mxu0 0.0
    %645 = vmatpush1.msra.mxu0 0.0
    %646 = vmatprep.subr.mxu0 0.0
    %647 = vmatpush1.msra.mxu0 0.0
    %648 = vmatprep.subr.mxu0 0.0
    %649 = vmatpush1.msra.mxu0 0.0
    %650 = vmatprep.subr.mxu0 0.0
    %651 = vmatpush1.msra.mxu0 0.0
    %652 = vmatprep.subr.mxu0 0.0
    %653 = vmatpush1.msra.mxu0 0.0
    %654 = vmatprep.subr.mxu0 0.0
    %655 = vmatpush1.msra.mxu0 0.0
    %656 = vmatprep.subr.mxu0 0.0
    %657 = vmatpush1.msra.mxu0 0.0
    %658 = vmatprep.subr.mxu0 0.0
    %659 = vmatpush1.msra.mxu0 0.0
    %660 = vmatprep.subr.mxu0 0.0
    %661 = vmatpush1.msra.mxu0 0.0
    %662 = vmatprep.subr.mxu0 0.0
    %663 = vmatpush1.msra.mxu0 0.0
    %664 = vmatprep.mubr.f32.mxu0 0.0
    %665 = vmatmul.mubr.f32.gmra.mrb[0].mxu0 %v598
    %v666 = vpop.f32.mrb[0].mxu0
    %v667 = vadd.f32 0.0, %v666
    %v668 = vpop.f32.mrb[0].mxu0
    %669 = vdwg.mxu0
    %v670 = vadd.f32 %v596, %v667
    %v671 = vtanh.pop %v670
    %672 = vst.msk [vmem:[#allocation2 + $0xc] sm:$0x3] %vm209, %v671
    %v673 = vld [vmem:[#allocation2 + $0xe] sm:$0x3]
    %v675 = vsel %vm130, %v671, 0
    %677 = vmatprep.subr.mxu0 0.0
    %678 = vmatpush1.msra.mxu0 %v35
    %679 = vmatprep.subr.mxu0 0.0
    %680 = vmatpush1.msra.mxu0 %v36
    %681 = vmatprep.subr.mxu0 0.0
    %682 = vmatpush1.msra.mxu0 %v37
    %683 = vmatprep.subr.mxu0 0.0
    %684 = vmatpush1.msra.mxu0 %v38
    %685 = vmatprep.subr.mxu0 0.0
    %686 = vmatpush1.msra.mxu0 0.0
    %687 = vmatprep.subr.mxu0 0.0
    %688 = vmatpush1.msra.mxu0 0.0
    %689 = vmatprep.subr.mxu0 0.0
    %690 = vmatpush1.msra.mxu0 0.0
    %691 = vmatprep.subr.mxu0 0.0
    %692 = vmatpush1.msra.mxu0 0.0
    %693 = vmatprep.subr.mxu0 0.0
    %694 = vmatpush1.msra.mxu0 0.0
    %695 = vmatprep.subr.mxu0 0.0
    %696 = vmatpush1.msra.mxu0 0.0
    %697 = vmatprep.subr.mxu0 0.0
    %698 = vmatpush1.msra.mxu0 0.0
    %699 = vmatprep.subr.mxu0 0.0
    %700 = vmatpush1.msra.mxu0 0.0
    %701 = vmatprep.subr.mxu0 0.0
    %702 = vmatpush1.msra.mxu0 0.0
    %703 = vmatprep.subr.mxu0 0.0
    %704 = vmatpush1.msra.mxu0 0.0
    %705 = vmatprep.subr.mxu0 0.0
    %706 = vmatpush1.msra.mxu0 0.0
    %707 = vmatprep.subr.mxu0 0.0
    %708 = vmatpush1.msra.mxu0 0.0
    %709 = vmatprep.subr.mxu0 0.0
    %710 = vmatpush1.msra.mxu0 0.0
    %711 = vmatprep.subr.mxu0 0.0
    %712 = vmatpush1.msra.mxu0 0.0
    %713 = vmatprep.subr.mxu0 0.0
    %714 = vmatpush1.msra.mxu0 0.0
    %715 = vmatprep.subr.mxu0 0.0
    %716 = vmatpush1.msra.mxu0 0.0
    %717 = vmatprep.subr.mxu0 0.0
    %718 = vmatpush1.msra.mxu0 0.0
    %719 = vmatprep.subr.mxu0 0.0
    %720 = vmatpush1.msra.mxu0 0.0
    %721 = vmatprep.subr.mxu0 0.0
    %722 = vmatpush1.msra.mxu0 0.0
    %723 = vmatprep.subr.mxu0 0.0
    %724 = vmatpush1.msra.mxu0 0.0
    %725 = vmatprep.subr.mxu0 0.0
    %726 = vmatpush1.msra.mxu0 0.0
    %727 = vmatprep.subr.mxu0 0.0
    %728 = vmatpush1.msra.mxu0 0.0
    %729 = vmatprep.subr.mxu0 0.0
    %730 = vmatpush1.msra.mxu0 0.0
    %731 = vmatprep.subr.mxu0 0.0
    %732 = vmatpush1.msra.mxu0 0.0
    %733 = vmatprep.subr.mxu0 0.0
    %734 = vmatpush1.msra.mxu0 0.0
    %735 = vmatprep.subr.mxu0 0.0
    %736 = vmatpush1.msra.mxu0 0.0
    %737 = vmatprep.subr.mxu0 0.0
    %738 = vmatpush1.msra.mxu0 0.0
    %739 = vmatprep.subr.mxu0 0.0
    %740 = vmatpush1.msra.mxu0 0.0
    %741 = vmatprep.mubr.f32.mxu0 0.0
    %742 = vmatmul.mubr.f32.gmra.mrb[0].mxu0 %v675
    %v743 = vpop.f32.mrb[0].mxu0
    %v744 = vadd.f32 0.0, %v743
    %v745 = vpop.f32.mrb[0].mxu0
    %746 = vdwg.mxu0
    %v747 = vadd.f32 %v673, %v744
    %v748 = vtanh.pop %v747
    %749 = vst.msk [vmem:[#allocation2 + $0xe] sm:$0x3] %vm209, %v748
    %v750 = vld [vmem:[%s4] sm:$0xff]
    %v751 = vld [vmem:[%s4 + $0x8] sm:$0xff]
    %v752 = vld [vmem:[%s4 + $0x10] sm:$0xff]
    %v753 = vld [vmem:[%s4 + $0x18] sm:$0xff]
    %v754 = vld [vmem:[%s5] sm:$0xff]
    %v755 = vld [vmem:[%s5 + $0x8] sm:$0xff]
    %v756 = vld [vmem:[%s5 + $0x10] sm:$0xff]
    %v757 = vld [vmem:[%s5 + $0x18] sm:$0xff]
    %v758 = vld [vmem:[%s6] sm:$0x1]
    %v759 = vld [vmem:[#allocation2] sm:$0xff]
    %v760 = vld [vmem:[#allocation2 + $0x8] sm:$0xff]
    %v762 = vlaneseq
    %v763 = vshrl.u32 %v762, 7
    %v764 = vsub.s32 0, %v763
    %v765 = vrot.slane %v758, %v764
    %v768 = vsel %vm130, %v759, 0
    %v771 = vsel %vm130, %v760, 0
    %773 = vmatprep.subr.mxu0 0.0
    %774 = vmatpush1.msra.mxu0 %v750
    %775 = vmatprep.subr.mxu0 0.0
    %776 = vmatpush1.msra.mxu0 %v751
    %777 = vmatprep.subr.mxu0 0.0
    %778 = vmatpush1.msra.mxu0 %v752
    %779 = vmatprep.subr.mxu0 0.0
    %780 = vmatpush1.msra.mxu0 %v753
    %781 = vmatprep.subr.mxu0 0.0
    %782 = vmatpush1.msra.mxu0 0.0
    %783 = vmatprep.subr.mxu0 0.0
    %784 = vmatpush1.msra.mxu0 0.0
    %785 = vmatprep.subr.mxu0 0.0
    %786 = vmatpush1.msra.mxu0 0.0
    %787 = vmatprep.subr.mxu0 0.0
    %788 = vmatpush1.msra.mxu0 0.0
    %789 = vmatprep.subr.mxu0 0.0
    %790 = vmatpush1.msra.mxu0 0.0
    %791 = vmatprep.subr.mxu0 0.0
    %792 = vmatpush1.msra.mxu0 0.0
    %793 = vmatprep.subr.mxu0 0.0
    %794 = vmatpush1.msra.mxu0 0.0
    %795 = vmatprep.subr.mxu0 0.0
    %796 = vmatpush1.msra.mxu0 0.0
    %797 = vmatprep.subr.mxu0 0.0
    %798 = vmatpush1.msra.mxu0 0.0
    %799 = vmatprep.subr.mxu0 0.0
    %800 = vmatpush1.msra.mxu0 0.0
    %801 = vmatprep.subr.mxu0 0.0
    %802 = vmatpush1.msra.mxu0 0.0
    %803 = vmatprep.subr.mxu0 0.0
    %804 = vmatpush1.msra.mxu0 0.0
    %805 = vmatprep.subr.mxu0 0.0
    %806 = vmatpush1.msra.mxu0 0.0
    %807 = vmatprep.subr.mxu0 0.0
    %808 = vmatpush1.msra.mxu0 0.0
    %809 = vmatprep.subr.mxu0 0.0
    %810 = vmatpush1.msra.mxu0 0.0
    %811 = vmatprep.subr.mxu0 0.0
    %812 = vmatpush1.msra.mxu0 0.0
    %813 = vmatprep.subr.mxu0 0.0
    %814 = vmatpush1.msra.mxu0 0.0
    %815 = vmatprep.subr.mxu0 0.0
    %816 = vmatpush1.msra.mxu0 0.0
    %817 = vmatprep.subr.mxu0 0.0
    %818 = vmatpush1.msra.mxu0 0.0
    %819 = vmatprep.subr.mxu0 0.0
    %820 = vmatpush1.msra.mxu0 0.0
    %821 = vmatprep.subr.mxu0 0.0
    %822 = vmatpush1.msra.mxu0 0.0
    %823 = vmatprep.subr.mxu0 0.0
    %824 = vmatpush1.msra.mxu0 0.0
    %825 = vmatprep.subr.mxu0 0.0
    %826 = vmatpush1.msra.mxu0 0.0
    %827 = vmatprep.subr.mxu0 0.0
    %828 = vmatpush1.msra.mxu0 0.0
    %829 = vmatprep.subr.mxu0 0.0
    %830 = vmatpush1.msra.mxu0 0.0
    %831 = vmatprep.subr.mxu0 0.0
    %832 = vmatpush1.msra.mxu0 0.0
    %833 = vmatprep.subr.mxu0 0.0
    %834 = vmatpush1.msra.mxu0 0.0
    %835 = vmatprep.subr.mxu0 0.0
    %836 = vmatpush1.msra.mxu0 0.0
    %837 = vmatprep.mubr.f32.mxu0 0.0
    %838 = vmatmul.mubr.f32.gmra.mrb[0].mxu0 %v768
    %v839 = vpop.f32.mrb[0].mxu0
    %v840 = vadd.f32 %v765, %v839
    %v841 = vpop.f32.mrb[0].mxu0
    %842 = vmatprep.mubr.f32.mxu0 0.0
    %843 = vmatmul.mubr.f32.gmra.mrb[0].mxu0 %v771
    %v844 = vpop.f32.mrb[0].mxu0
    %v845 = vadd.f32 %v765, %v844
    %v846 = vpop.f32.mrb[0].mxu0
    %847 = vdwg.mxu0
    %848 = vst.msk [vmem:[#allocation2] sm:$0xff] %vm130, %v840
    %849 = vst.msk [vmem:[#allocation2 + $0x8] sm:$0xff] %vm130, %v845
    %v850 = vld [vmem:[#allocation2] sm:$0x3]
    %851 = vmatprep.subr.mxu0 0.0
    %852 = vmatpush1.msra.mxu0 %v754
    %853 = vmatprep.subr.mxu0 0.0
    %854 = vmatpush1.msra.mxu0 %v755
    %855 = vmatprep.subr.mxu0 0.0
    %856 = vmatpush1.msra.mxu0 %v756
    %857 = vmatprep.subr.mxu0 0.0
    %858 = vmatpush1.msra.mxu0 %v757
    %859 = vmatprep.subr.mxu0 0.0
    %860 = vmatpush1.msra.mxu0 0.0
    %861 = vmatprep.subr.mxu0 0.0
    %862 = vmatpush1.msra.mxu0 0.0
    %863 = vmatprep.subr.mxu0 0.0
    %864 = vmatpush1.msra.mxu0 0.0
    %865 = vmatprep.subr.mxu0 0.0
    %866 = vmatpush1.msra.mxu0 0.0
    %867 = vmatprep.subr.mxu0 0.0
    %868 = vmatpush1.msra.mxu0 0.0
    %869 = vmatprep.subr.mxu0 0.0
    %870 = vmatpush1.msra.mxu0 0.0
    %871 = vmatprep.subr.mxu0 0.0
    %872 = vmatpush1.msra.mxu0 0.0
    %873 = vmatprep.subr.mxu0 0.0
    %874 = vmatpush1.msra.mxu0 0.0
    %875 = vmatprep.subr.mxu0 0.0
    %876 = vmatpush1.msra.mxu0 0.0
    %877 = vmatprep.subr.mxu0 0.0
    %878 = vmatpush1.msra.mxu0 0.0
    %879 = vmatprep.subr.mxu0 0.0
    %880 = vmatpush1.msra.mxu0 0.0
    %881 = vmatprep.subr.mxu0 0.0
    %882 = vmatpush1.msra.mxu0 0.0
    %883 = vmatprep.subr.mxu0 0.0
    %884 = vmatpush1.msra.mxu0 0.0
    %885 = vmatprep.subr.mxu0 0.0
    %886 = vmatpush1.msra.mxu0 0.0
    %887 = vmatprep.subr.mxu0 0.0
    %888 = vmatpush1.msra.mxu0 0.0
    %889 = vmatprep.subr.mxu0 0.0
    %890 = vmatpush1.msra.mxu0 0.0
    %891 = vmatprep.subr.mxu0 0.0
    %892 = vmatpush1.msra.mxu0 0.0
    %893 = vmatprep.subr.mxu0 0.0
    %894 = vmatpush1.msra.mxu0 0.0
    %895 = vmatprep.subr.mxu0 0.0
    %896 = vmatpush1.msra.mxu0 0.0
    %897 = vmatprep.subr.mxu0 0.0
    %898 = vmatpush1.msra.mxu0 0.0
    %899 = vmatprep.subr.mxu0 0.0
    %900 = vmatpush1.msra.mxu0 0.0
    %901 = vmatprep.subr.mxu0 0.0
    %902 = vmatpush1.msra.mxu0 0.0
    %903 = vmatprep.subr.mxu0 0.0
    %904 = vmatpush1.msra.mxu0 0.0
    %905 = vmatprep.subr.mxu0 0.0
    %906 = vmatpush1.msra.mxu0 0.0
    %907 = vmatprep.subr.mxu0 0.0
    %908 = vmatpush1.msra.mxu0 0.0
    %909 = vmatprep.subr.mxu0 0.0
    %910 = vmatpush1.msra.mxu0 0.0
    %911 = vmatprep.subr.mxu0 0.0
    %912 = vmatpush1.msra.mxu0 0.0
    %913 = vmatprep.subr.mxu0 0.0
    %914 = vmatpush1.msra.mxu0 0.0
    %915 = vmatprep.mubr.f32.mxu0 0.0
    %916 = vmatmul.mubr.f32.gmra.mrb[0].mxu0 %v135
    %v917 = vpop.f32.mrb[0].mxu0
    %v918 = vadd.f32 0.0, %v917
    %v919 = vpop.f32.mrb[0].mxu0
    %920 = vdwg.mxu0
    %v921 = vadd.f32 %v850, %v918
    %v922 = vtanh.pop %v921
    %923 = vst.msk [vmem:[#allocation3] sm:$0x3] %vm209, %v922
    %v924 = vld [vmem:[#allocation2 + $0x2] sm:$0x3]
    %v926 = vsel %vm130, %v922, 0
    %928 = vmatprep.subr.mxu0 0.0
    %929 = vmatpush1.msra.mxu0 %v754
    %930 = vmatprep.subr.mxu0 0.0
    %931 = vmatpush1.msra.mxu0 %v755
    %932 = vmatprep.subr.mxu0 0.0
    %933 = vmatpush1.msra.mxu0 %v756
    %934 = vmatprep.subr.mxu0 0.0
    %935 = vmatpush1.msra.mxu0 %v757
    %936 = vmatprep.subr.mxu0 0.0
    %937 = vmatpush1.msra.mxu0 0.0
    %938 = vmatprep.subr.mxu0 0.0
    %939 = vmatpush1.msra.mxu0 0.0
    %940 = vmatprep.subr.mxu0 0.0
    %941 = vmatpush1.msra.mxu0 0.0
    %942 = vmatprep.subr.mxu0 0.0
    %943 = vmatpush1.msra.mxu0 0.0
    %944 = vmatprep.subr.mxu0 0.0
    %945 = vmatpush1.msra.mxu0 0.0
    %946 = vmatprep.subr.mxu0 0.0
    %947 = vmatpush1.msra.mxu0 0.0
    %948 = vmatprep.subr.mxu0 0.0
    %949 = vmatpush1.msra.mxu0 0.0
    %950 = vmatprep.subr.mxu0 0.0
    %951 = vmatpush1.msra.mxu0 0.0
    %952 = vmatprep.subr.mxu0 0.0
    %953 = vmatpush1.msra.mxu0 0.0
    %954 = vmatprep.subr.mxu0 0.0
    %955 = vmatpush1.msra.mxu0 0.0
    %956 = vmatprep.subr.mxu0 0.0
    %957 = vmatpush1.msra.mxu0 0.0
    %958 = vmatprep.subr.mxu0 0.0
    %959 = vmatpush1.msra.mxu0 0.0
    %960 = vmatprep.subr.mxu0 0.0
    %961 = vmatpush1.msra.mxu0 0.0
    %962 = vmatprep.subr.mxu0 0.0
    %963 = vmatpush1.msra.mxu0 0.0
    %964 = vmatprep.subr.mxu0 0.0
    %965 = vmatpush1.msra.mxu0 0.0
    %966 = vmatprep.subr.mxu0 0.0
    %967 = vmatpush1.msra.mxu0 0.0
    %968 = vmatprep.subr.mxu0 0.0
    %969 = vmatpush1.msra.mxu0 0.0
    %970 = vmatprep.subr.mxu0 0.0
    %971 = vmatpush1.msra.mxu0 0.0
    %972 = vmatprep.subr.mxu0 0.0
    %973 = vmatpush1.msra.mxu0 0.0
    %974 = vmatprep.subr.mxu0 0.0
    %975 = vmatpush1.msra.mxu0 0.0
    %976 = vmatprep.subr.mxu0 0.0
    %977 = vmatpush1.msra.mxu0 0.0
    %978 = vmatprep.subr.mxu0 0.0
    %979 = vmatpush1.msra.mxu0 0.0
    %980 = vmatprep.subr.mxu0 0.0
    %981 = vmatpush1.msra.mxu0 0.0
    %982 = vmatprep.subr.mxu0 0.0
    %983 = vmatpush1.msra.mxu0 0.0
    %984 = vmatprep.subr.mxu0 0.0
    %985 = vmatpush1.msra.mxu0 0.0
    %986 = vmatprep.subr.mxu0 0.0
    %987 = vmatpush1.msra.mxu0 0.0
    %988 = vmatprep.subr.mxu0 0.0
    %989 = vmatpush1.msra.mxu0 0.0
    %990 = vmatprep.subr.mxu0 0.0
    %991 = vmatpush1.msra.mxu0 0.0
    %992 = vmatprep.mubr.f32.mxu0 0.0
    %993 = vmatmul.mubr.f32.gmra.mrb[0].mxu0 %v926
    %v994 = vpop.f32.mrb[0].mxu0
    %v995 = vadd.f32 0.0, %v994
    %v996 = vpop.f32.mrb[0].mxu0
    %997 = vdwg.mxu0
    %v998 = vadd.f32 %v924, %v995
    %v999 = vtanh.pop %v998
    %v1002 = vunpack.c.l.s4 1983009808
    %v1003 = vunpack.c.0.s8 %v1002
    %v1004 = vlaneseq
    %v1005 = vshrl.u32 %v1004, 7
    %v1006 = vsub.s32 %v1003, %v1005
    %v1007 = vrot.slane %v999, %v1006
    %1008 = vrot.lane.b32.xlu0 %v1007, 32
    %v1009 = vpop.permute.xlu0 %1008
    %vm1011 = vcmask 517376
    %1012 = vst.msk [vmem:[#allocation3] sm:$0x3] %vm1011, %v1009
    %v1013 = vld [vmem:[#allocation2 + $0x4] sm:$0x3]
    %v1014 = vsel %vm130, %v999, 0
    %1016 = vmatprep.subr.mxu0 0.0
    %1017 = vmatpush1.msra.mxu0 %v754
    %1018 = vmatprep.subr.mxu0 0.0
    %1019 = vmatpush1.msra.mxu0 %v755
    %1020 = vmatprep.subr.mxu0 0.0
    %1021 = vmatpush1.msra.mxu0 %v756
    %1022 = vmatprep.subr.mxu0 0.0
    %1023 = vmatpush1.msra.mxu0 %v757
    %1024 = vmatprep.subr.mxu0 0.0
    %1025 = vmatpush1.msra.mxu0 0.0
    %1026 = vmatprep.subr.mxu0 0.0
    %1027 = vmatpush1.msra.mxu0 0.0
    %1028 = vmatprep.subr.mxu0 0.0
    %1029 = vmatpush1.msra.mxu0 0.0
    %1030 = vmatprep.subr.mxu0 0.0
    %1031 = vmatpush1.msra.mxu0 0.0
    %1032 = vmatprep.subr.mxu0 0.0
    %1033 = vmatpush1.msra.mxu0 0.0
    %1034 = vmatprep.subr.mxu0 0.0
    %1035 = vmatpush1.msra.mxu0 0.0
    %1036 = vmatprep.subr.mxu0 0.0
    %1037 = vmatpush1.msra.mxu0 0.0
    %1038 = vmatprep.subr.mxu0 0.0
    %1039 = vmatpush1.msra.mxu0 0.0
    %1040 = vmatprep.subr.mxu0 0.0
    %1041 = vmatpush1.msra.mxu0 0.0
    %1042 = vmatprep.subr.mxu0 0.0
    %1043 = vmatpush1.msra.mxu0 0.0
    %1044 = vmatprep.subr.mxu0 0.0
    %1045 = vmatpush1.msra.mxu0 0.0
    %1046 = vmatprep.subr.mxu0 0.0
    %1047 = vmatpush1.msra.mxu0 0.0
    %1048 = vmatprep.subr.mxu0 0.0
    %1049 = vmatpush1.msra.mxu0 0.0
    %1050 = vmatprep.subr.mxu0 0.0
    %1051 = vmatpush1.msra.mxu0 0.0
    %1052 = vmatprep.subr.mxu0 0.0
    %1053 = vmatpush1.msra.mxu0 0.0
    %1054 = vmatprep.subr.mxu0 0.0
    %1055 = vmatpush1.msra.mxu0 0.0
    %1056 = vmatprep.subr.mxu0 0.0
    %1057 = vmatpush1.msra.mxu0 0.0
    %1058 = vmatprep.subr.mxu0 0.0
    %1059 = vmatpush1.msra.mxu0 0.0
    %1060 = vmatprep.subr.mxu0 0.0
    %1061 = vmatpush1.msra.mxu0 0.0
    %1062 = vmatprep.subr.mxu0 0.0
    %1063 = vmatpush1.msra.mxu0 0.0
    %1064 = vmatprep.subr.mxu0 0.0
    %1065 = vmatpush1.msra.mxu0 0.0
    %1066 = vmatprep.subr.mxu0 0.0
    %1067 = vmatpush1.msra.mxu0 0.0
    %1068 = vmatprep.subr.mxu0 0.0
    %1069 = vmatpush1.msra.mxu0 0.0
    %1070 = vmatprep.subr.mxu0 0.0
    %1071 = vmatpush1.msra.mxu0 0.0
    %1072 = vmatprep.subr.mxu0 0.0
    %1073 = vmatpush1.msra.mxu0 0.0
    %1074 = vmatprep.subr.mxu0 0.0
    %1075 = vmatpush1.msra.mxu0 0.0
    %1076 = vmatprep.subr.mxu0 0.0
    %1077 = vmatpush1.msra.mxu0 0.0
    %1078 = vmatprep.subr.mxu0 0.0
    %1079 = vmatpush1.msra.mxu0 0.0
    %1080 = vmatprep.mubr.f32.mxu0 0.0
    %1081 = vmatmul.mubr.f32.gmra.mrb[0].mxu0 %v1014
    %v1082 = vpop.f32.mrb[0].mxu0
    %v1083 = vadd.f32 0.0, %v1082
    %v1084 = vpop.f32.mrb[0].mxu0
    %1085 = vdwg.mxu0
    %v1086 = vadd.f32 %v1013, %v1083
    %v1087 = vtanh.pop %v1086
    %v1090 = vunpack.c.l.s4 1983009808
    %v1091 = vunpack.c.0.s8 %v1090
    %v1092 = vlaneseq
    %v1093 = vshrl.u32 %v1092, 7
    %v1094 = vsub.s32 %v1091, %v1093
    %v1095 = vrot.slane %v1087, %v1094
    %1096 = vrot.lane.b32.xlu0 %v1095, 64
    %v1097 = vpop.permute.xlu0 %1096
    %vm1099 = vcmask 779776
    %1100 = vst.msk [vmem:[#allocation3] sm:$0x3] %vm1099, %v1097
    %v1101 = vld [vmem:[#allocation2 + $0x6] sm:$0x3]
    %v1102 = vsel %vm130, %v1087, 0
    %1104 = vmatprep.subr.mxu0 0.0
    %1105 = vmatpush1.msra.mxu0 %v754
    %1106 = vmatprep.subr.mxu0 0.0
    %1107 = vmatpush1.msra.mxu0 %v755
    %1108 = vmatprep.subr.mxu0 0.0
    %1109 = vmatpush1.msra.mxu0 %v756
    %1110 = vmatprep.subr.mxu0 0.0
    %1111 = vmatpush1.msra.mxu0 %v757
    %1112 = vmatprep.subr.mxu0 0.0
    %1113 = vmatpush1.msra.mxu0 0.0
    %1114 = vmatprep.subr.mxu0 0.0
    %1115 = vmatpush1.msra.mxu0 0.0
    %1116 = vmatprep.subr.mxu0 0.0
    %1117 = vmatpush1.msra.mxu0 0.0
    %1118 = vmatprep.subr.mxu0 0.0
    %1119 = vmatpush1.msra.mxu0 0.0
    %1120 = vmatprep.subr.mxu0 0.0
    %1121 = vmatpush1.msra.mxu0 0.0
    %1122 = vmatprep.subr.mxu0 0.0
    %1123 = vmatpush1.msra.mxu0 0.0
    %1124 = vmatprep.subr.mxu0 0.0
    %1125 = vmatpush1.msra.mxu0 0.0
    %1126 = vmatprep.subr.mxu0 0.0
    %1127 = vmatpush1.msra.mxu0 0.0
    %1128 = vmatprep.subr.mxu0 0.0
    %1129 = vmatpush1.msra.mxu0 0.0
    %1130 = vmatprep.subr.mxu0 0.0
    %1131 = vmatpush1.msra.mxu0 0.0
    %1132 = vmatprep.subr.mxu0 0.0
    %1133 = vmatpush1.msra.mxu0 0.0
    %1134 = vmatprep.subr.mxu0 0.0
    %1135 = vmatpush1.msra.mxu0 0.0
    %1136 = vmatprep.subr.mxu0 0.0
    %1137 = vmatpush1.msra.mxu0 0.0
    %1138 = vmatprep.subr.mxu0 0.0
    %1139 = vmatpush1.msra.mxu0 0.0
    %1140 = vmatprep.subr.mxu0 0.0
    %1141 = vmatpush1.msra.mxu0 0.0
    %1142 = vmatprep.subr.mxu0 0.0
    %1143 = vmatpush1.msra.mxu0 0.0
    %1144 = vmatprep.subr.mxu0 0.0
    %1145 = vmatpush1.msra.mxu0 0.0
    %1146 = vmatprep.subr.mxu0 0.0
    %1147 = vmatpush1.msra.mxu0 0.0
    %1148 = vmatprep.subr.mxu0 0.0
    %1149 = vmatpush1.msra.mxu0 0.0
    %1150 = vmatprep.subr.mxu0 0.0
    %1151 = vmatpush1.msra.mxu0 0.0
    %1152 = vmatprep.subr.mxu0 0.0
    %1153 = vmatpush1.msra.mxu0 0.0
    %1154 = vmatprep.subr.mxu0 0.0
    %1155 = vmatpush1.msra.mxu0 0.0
    %1156 = vmatprep.subr.mxu0 0.0
    %1157 = vmatpush1.msra.mxu0 0.0
    %1158 = vmatprep.subr.mxu0 0.0
    %1159 = vmatpush1.msra.mxu0 0.0
    %1160 = vmatprep.subr.mxu0 0.0
    %1161 = vmatpush1.msra.mxu0 0.0
    %1162 = vmatprep.subr.mxu0 0.0
    %1163 = vmatpush1.msra.mxu0 0.0
    %1164 = vmatprep.subr.mxu0 0.0
    %1165 = vmatpush1.msra.mxu0 0.0
    %1166 = vmatprep.subr.mxu0 0.0
    %1167 = vmatpush1.msra.mxu0 0.0
    %1168 = vmatprep.mubr.f32.mxu0 0.0
    %1169 = vmatmul.mubr.f32.gmra.mrb[0].mxu0 %v1102
    %v1170 = vpop.f32.mrb[0].mxu0
    %v1171 = vadd.f32 0.0, %v1170
    %v1172 = vpop.f32.mrb[0].mxu0
    %1173 = vdwg.mxu0
    %v1174 = vadd.f32 %v1101, %v1171
    %v1175 = vtanh.pop %v1174
    %v1178 = vunpack.c.l.s4 1983009808
    %v1179 = vunpack.c.0.s8 %v1178
    %v1180 = vlaneseq
    %v1181 = vshrl.u32 %v1180, 7
    %v1182 = vsub.s32 %v1179, %v1181
    %v1183 = vrot.slane %v1175, %v1182
    %1184 = vrot.lane.b32.xlu0 %v1183, 96
    %v1185 = vpop.permute.xlu0 %1184
    %vm1187 = vcmask 1042176
    %1188 = vst.msk [vmem:[#allocation3] sm:$0x3] %vm1187, %v1185
    %v1189 = vld [vmem:[#allocation2 + $0x8] sm:$0x3]
    %v1190 = vsel %vm130, %v1175, 0
    %1192 = vmatprep.subr.mxu0 0.0
    %1193 = vmatpush1.msra.mxu0 %v754
    %1194 = vmatprep.subr.mxu0 0.0
    %1195 = vmatpush1.msra.mxu0 %v755
    %1196 = vmatprep.subr.mxu0 0.0
    %1197 = vmatpush1.msra.mxu0 %v756
    %1198 = vmatprep.subr.mxu0 0.0
    %1199 = vmatpush1.msra.mxu0 %v757
    %1200 = vmatprep.subr.mxu0 0.0
    %1201 = vmatpush1.msra.mxu0 0.0
    %1202 = vmatprep.subr.mxu0 0.0
    %1203 = vmatpush1.msra.mxu0 0.0
    %1204 = vmatprep.subr.mxu0 0.0
    %1205 = vmatpush1.msra.mxu0 0.0
    %1206 = vmatprep.subr.mxu0 0.0
    %1207 = vmatpush1.msra.mxu0 0.0
    %1208 = vmatprep.subr.mxu0 0.0
    %1209 = vmatpush1.msra.mxu0 0.0
    %1210 = vmatprep.subr.mxu0 0.0
    %1211 = vmatpush1.msra.mxu0 0.0
    %1212 = vmatprep.subr.mxu0 0.0
    %1213 = vmatpush1.msra.mxu0 0.0
    %1214 = vmatprep.subr.mxu0 0.0
    %1215 = vmatpush1.msra.mxu0 0.0
    %1216 = vmatprep.subr.mxu0 0.0
    %1217 = vmatpush1.msra.mxu0 0.0
    %1218 = vmatprep.subr.mxu0 0.0
    %1219 = vmatpush1.msra.mxu0 0.0
    %1220 = vmatprep.subr.mxu0 0.0
    %1221 = vmatpush1.msra.mxu0 0.0
    %1222 = vmatprep.subr.mxu0 0.0
    %1223 = vmatpush1.msra.mxu0 0.0
    %1224 = vmatprep.subr.mxu0 0.0
    %1225 = vmatpush1.msra.mxu0 0.0
    %1226 = vmatprep.subr.mxu0 0.0
    %1227 = vmatpush1.msra.mxu0 0.0
    %1228 = vmatprep.subr.mxu0 0.0
    %1229 = vmatpush1.msra.mxu0 0.0
    %1230 = vmatprep.subr.mxu0 0.0
    %1231 = vmatpush1.msra.mxu0 0.0
    %1232 = vmatprep.subr.mxu0 0.0
    %1233 = vmatpush1.msra.mxu0 0.0
    %1234 = vmatprep.subr.mxu0 0.0
    %1235 = vmatpush1.msra.mxu0 0.0
    %1236 = vmatprep.subr.mxu0 0.0
    %1237 = vmatpush1.msra.mxu0 0.0
    %1238 = vmatprep.subr.mxu0 0.0
    %1239 = vmatpush1.msra.mxu0 0.0
    %1240 = vmatprep.subr.mxu0 0.0
    %1241 = vmatpush1.msra.mxu0 0.0
    %1242 = vmatprep.subr.mxu0 0.0
    %1243 = vmatpush1.msra.mxu0 0.0
    %1244 = vmatprep.subr.mxu0 0.0
    %1245 = vmatpush1.msra.mxu0 0.0
    %1246 = vmatprep.subr.mxu0 0.0
    %1247 = vmatpush1.msra.mxu0 0.0
    %1248 = vmatprep.subr.mxu0 0.0
    %1249 = vmatpush1.msra.mxu0 0.0
    %1250 = vmatprep.subr.mxu0 0.0
    %1251 = vmatpush1.msra.mxu0 0.0
    %1252 = vmatprep.subr.mxu0 0.0
    %1253 = vmatpush1.msra.mxu0 0.0
    %1254 = vmatprep.subr.mxu0 0.0
    %1255 = vmatpush1.msra.mxu0 0.0
    %1256 = vmatprep.mubr.f32.mxu0 0.0
    %1257 = vmatmul.mubr.f32.gmra.mrb[0].mxu0 %v1190
    %v1258 = vpop.f32.mrb[0].mxu0
    %v1259 = vadd.f32 0.0, %v1258
    %v1260 = vpop.f32.mrb[0].mxu0
    %1261 = vdwg.mxu0
    %v1262 = vadd.f32 %v1189, %v1259
    %v1263 = vtanh.pop %v1262
    %1264 = vst.msk [vmem:[#allocation3 + $0x2] sm:$0x3] %vm209, %v1263
    %v1265 = vld [vmem:[#allocation2 + $0xa] sm:$0x3]
    %v1267 = vsel %vm130, %v1263, 0
    %1269 = vmatprep.subr.mxu0 0.0
    %1270 = vmatpush1.msra.mxu0 %v754
    %1271 = vmatprep.subr.mxu0 0.0
    %1272 = vmatpush1.msra.mxu0 %v755
    %1273 = vmatprep.subr.mxu0 0.0
    %1274 = vmatpush1.msra.mxu0 %v756
    %1275 = vmatprep.subr.mxu0 0.0
    %1276 = vmatpush1.msra.mxu0 %v757
    %1277 = vmatprep.subr.mxu0 0.0
    %1278 = vmatpush1.msra.mxu0 0.0
    %1279 = vmatprep.subr.mxu0 0.0
    %1280 = vmatpush1.msra.mxu0 0.0
    %1281 = vmatprep.subr.mxu0 0.0
    %1282 = vmatpush1.msra.mxu0 0.0
    %1283 = vmatprep.subr.mxu0 0.0
    %1284 = vmatpush1.msra.mxu0 0.0
    %1285 = vmatprep.subr.mxu0 0.0
    %1286 = vmatpush1.msra.mxu0 0.0
    %1287 = vmatprep.subr.mxu0 0.0
    %1288 = vmatpush1.msra.mxu0 0.0
    %1289 = vmatprep.subr.mxu0 0.0
    %1290 = vmatpush1.msra.mxu0 0.0
    %1291 = vmatprep.subr.mxu0 0.0
    %1292 = vmatpush1.msra.mxu0 0.0
    %1293 = vmatprep.subr.mxu0 0.0
    %1294 = vmatpush1.msra.mxu0 0.0
    %1295 = vmatprep.subr.mxu0 0.0
    %1296 = vmatpush1.msra.mxu0 0.0
    %1297 = vmatprep.subr.mxu0 0.0
    %1298 = vmatpush1.msra.mxu0 0.0
    %1299 = vmatprep.subr.mxu0 0.0
    %1300 = vmatpush1.msra.mxu0 0.0
    %1301 = vmatprep.subr.mxu0 0.0
    %1302 = vmatpush1.msra.mxu0 0.0
    %1303 = vmatprep.subr.mxu0 0.0
    %1304 = vmatpush1.msra.mxu0 0.0
    %1305 = vmatprep.subr.mxu0 0.0
    %1306 = vmatpush1.msra.mxu0 0.0
    %1307 = vmatprep.subr.mxu0 0.0
    %1308 = vmatpush1.msra.mxu0 0.0
    %1309 = vmatprep.subr.mxu0 0.0
    %1310 = vmatpush1.msra.mxu0 0.0
    %1311 = vmatprep.subr.mxu0 0.0
    %1312 = vmatpush1.msra.mxu0 0.0
    %1313 = vmatprep.subr.mxu0 0.0
    %1314 = vmatpush1.msra.mxu0 0.0
    %1315 = vmatprep.subr.mxu0 0.0
    %1316 = vmatpush1.msra.mxu0 0.0
    %1317 = vmatprep.subr.mxu0 0.0
    %1318 = vmatpush1.msra.mxu0 0.0
    %1319 = vmatprep.subr.mxu0 0.0
    %1320 = vmatpush1.msra.mxu0 0.0
    %1321 = vmatprep.subr.mxu0 0.0
    %1322 = vmatpush1.msra.mxu0 0.0
    %1323 = vmatprep.subr.mxu0 0.0
    %1324 = vmatpush1.msra.mxu0 0.0
    %1325 = vmatprep.subr.mxu0 0.0
    %1326 = vmatpush1.msra.mxu0 0.0
    %1327 = vmatprep.subr.mxu0 0.0
    %1328 = vmatpush1.msra.mxu0 0.0
    %1329 = vmatprep.subr.mxu0 0.0
    %1330 = vmatpush1.msra.mxu0 0.0
    %1331 = vmatprep.subr.mxu0 0.0
    %1332 = vmatpush1.msra.mxu0 0.0
    %1333 = vmatprep.mubr.f32.mxu0 0.0
    %1334 = vmatmul.mubr.f32.gmra.mrb[0].mxu0 %v1267
    %v1335 = vpop.f32.mrb[0].mxu0
    %v1336 = vadd.f32 0.0, %v1335
    %v1337 = vpop.f32.mrb[0].mxu0
    %1338 = vdwg.mxu0
    %v1339 = vadd.f32 %v1265, %v1336
    %v1340 = vtanh.pop %v1339
    %v1343 = vunpack.c.l.s4 1983009808
    %v1344 = vunpack.c.0.s8 %v1343
    %v1345 = vlaneseq
    %v1346 = vshrl.u32 %v1345, 7
    %v1347 = vsub.s32 %v1344, %v1346
    %v1348 = vrot.slane %v1340, %v1347
    %1349 = vrot.lane.b32.xlu0 %v1348, 32
    %v1350 = vpop.permute.xlu0 %1349
    %1352 = vst.msk [vmem:[#allocation3 + $0x2] sm:$0x3] %vm1011, %v1350
    %v1353 = vld [vmem:[#allocation2 + $0xc] sm:$0x3]
    %v1354 = vsel %vm130, %v1340, 0
    %1356 = vmatprep.subr.mxu0 0.0
    %1357 = vmatpush1.msra.mxu0 %v754
    %1358 = vmatprep.subr.mxu0 0.0
    %1359 = vmatpush1.msra.mxu0 %v755
    %1360 = vmatprep.subr.mxu0 0.0
    %1361 = vmatpush1.msra.mxu0 %v756
    %1362 = vmatprep.subr.mxu0 0.0
    %1363 = vmatpush1.msra.mxu0 %v757
    %1364 = vmatprep.subr.mxu0 0.0
    %1365 = vmatpush1.msra.mxu0 0.0
    %1366 = vmatprep.subr.mxu0 0.0
    %1367 = vmatpush1.msra.mxu0 0.0
    %1368 = vmatprep.subr.mxu0 0.0
    %1369 = vmatpush1.msra.mxu0 0.0
    %1370 = vmatprep.subr.mxu0 0.0
    %1371 = vmatpush1.msra.mxu0 0.0
    %1372 = vmatprep.subr.mxu0 0.0
    %1373 = vmatpush1.msra.mxu0 0.0
    %1374 = vmatprep.subr.mxu0 0.0
    %1375 = vmatpush1.msra.mxu0 0.0
    %1376 = vmatprep.subr.mxu0 0.0
    %1377 = vmatpush1.msra.mxu0 0.0
    %1378 = vmatprep.subr.mxu0 0.0
    %1379 = vmatpush1.msra.mxu0 0.0
    %1380 = vmatprep.subr.mxu0 0.0
    %1381 = vmatpush1.msra.mxu0 0.0
    %1382 = vmatprep.subr.mxu0 0.0
    %1383 = vmatpush1.msra.mxu0 0.0
    %1384 = vmatprep.subr.mxu0 0.0
    %1385 = vmatpush1.msra.mxu0 0.0
    %1386 = vmatprep.subr.mxu0 0.0
    %1387 = vmatpush1.msra.mxu0 0.0
    %1388 = vmatprep.subr.mxu0 0.0
    %1389 = vmatpush1.msra.mxu0 0.0
    %1390 = vmatprep.subr.mxu0 0.0
    %1391 = vmatpush1.msra.mxu0 0.0
    %1392 = vmatprep.subr.mxu0 0.0
    %1393 = vmatpush1.msra.mxu0 0.0
    %1394 = vmatprep.subr.mxu0 0.0
    %1395 = vmatpush1.msra.mxu0 0.0
    %1396 = vmatprep.subr.mxu0 0.0
    %1397 = vmatpush1.msra.mxu0 0.0
    %1398 = vmatprep.subr.mxu0 0.0
    %1399 = vmatpush1.msra.mxu0 0.0
    %1400 = vmatprep.subr.mxu0 0.0
    %1401 = vmatpush1.msra.mxu0 0.0
    %1402 = vmatprep.subr.mxu0 0.0
    %1403 = vmatpush1.msra.mxu0 0.0
    %1404 = vmatprep.subr.mxu0 0.0
    %1405 = vmatpush1.msra.mxu0 0.0
    %1406 = vmatprep.subr.mxu0 0.0
    %1407 = vmatpush1.msra.mxu0 0.0
    %1408 = vmatprep.subr.mxu0 0.0
    %1409 = vmatpush1.msra.mxu0 0.0
    %1410 = vmatprep.subr.mxu0 0.0
    %1411 = vmatpush1.msra.mxu0 0.0
    %1412 = vmatprep.subr.mxu0 0.0
    %1413 = vmatpush1.msra.mxu0 0.0
    %1414 = vmatprep.subr.mxu0 0.0
    %1415 = vmatpush1.msra.mxu0 0.0
    %1416 = vmatprep.subr.mxu0 0.0
    %1417 = vmatpush1.msra.mxu0 0.0
    %1418 = vmatprep.subr.mxu0 0.0
    %1419 = vmatpush1.msra.mxu0 0.0
    %1420 = vmatprep.mubr.f32.mxu0 0.0
    %1421 = vmatmul.mubr.f32.gmra.mrb[0].mxu0 %v1354
    %v1422 = vpop.f32.mrb[0].mxu0
    %v1423 = vadd.f32 0.0, %v1422
    %v1424 = vpop.f32.mrb[0].mxu0
    %1425 = vdwg.mxu0
    %v1426 = vadd.f32 %v1353, %v1423
    %v1427 = vtanh.pop %v1426
    %v1430 = vunpack.c.l.s4 1983009808
    %v1431 = vunpack.c.0.s8 %v1430
    %v1432 = vlaneseq
    %v1433 = vshrl.u32 %v1432, 7
    %v1434 = vsub.s32 %v1431, %v1433
    %v1435 = vrot.slane %v1427, %v1434
    %1436 = vrot.lane.b32.xlu0 %v1435, 64
    %v1437 = vpop.permute.xlu0 %1436
    %1439 = vst.msk [vmem:[#allocation3 + $0x2] sm:$0x3] %vm1099, %v1437
    %v1440 = vld [vmem:[#allocation2 + $0xe] sm:$0x3]
    %v1441 = vsel %vm130, %v1427, 0
    %1443 = vmatprep.subr.mxu0 0.0
    %1444 = vmatpush1.msra.mxu0 %v754
    %1445 = vmatprep.subr.mxu0 0.0
    %1446 = vmatpush1.msra.mxu0 %v755
    %1447 = vmatprep.subr.mxu0 0.0
    %1448 = vmatpush1.msra.mxu0 %v756
    %1449 = vmatprep.subr.mxu0 0.0
    %1450 = vmatpush1.msra.mxu0 %v757
    %1451 = vmatprep.subr.mxu0 0.0
    %1452 = vmatpush1.msra.mxu0 0.0
    %1453 = vmatprep.subr.mxu0 0.0
    %1454 = vmatpush1.msra.mxu0 0.0
    %1455 = vmatprep.subr.mxu0 0.0
    %1456 = vmatpush1.msra.mxu0 0.0
    %1457 = vmatprep.subr.mxu0 0.0
    %1458 = vmatpush1.msra.mxu0 0.0
    %1459 = vmatprep.subr.mxu0 0.0
    %1460 = vmatpush1.msra.mxu0 0.0
    %1461 = vmatprep.subr.mxu0 0.0
    %1462 = vmatpush1.msra.mxu0 0.0
    %1463 = vmatprep.subr.mxu0 0.0
    %1464 = vmatpush1.msra.mxu0 0.0
    %1465 = vmatprep.subr.mxu0 0.0
    %1466 = vmatpush1.msra.mxu0 0.0
    %1467 = vmatprep.subr.mxu0 0.0
    %1468 = vmatpush1.msra.mxu0 0.0
    %1469 = vmatprep.subr.mxu0 0.0
    %1470 = vmatpush1.msra.mxu0 0.0
    %1471 = vmatprep.subr.mxu0 0.0
    %1472 = vmatpush1.msra.mxu0 0.0
    %1473 = vmatprep.subr.mxu0 0.0
    %1474 = vmatpush1.msra.mxu0 0.0
    %1475 = vmatprep.subr.mxu0 0.0
    %1476 = vmatpush1.msra.mxu0 0.0
    %1477 = vmatprep.subr.mxu0 0.0
    %1478 = vmatpush1.msra.mxu0 0.0
    %1479 = vmatprep.subr.mxu0 0.0
    %1480 = vmatpush1.msra.mxu0 0.0
    %1481 = vmatprep.subr.mxu0 0.0
    %1482 = vmatpush1.msra.mxu0 0.0
    %1483 = vmatprep.subr.mxu0 0.0
    %1484 = vmatpush1.msra.mxu0 0.0
    %1485 = vmatprep.subr.mxu0 0.0
    %1486 = vmatpush1.msra.mxu0 0.0
    %1487 = vmatprep.subr.mxu0 0.0
    %1488 = vmatpush1.msra.mxu0 0.0
    %1489 = vmatprep.subr.mxu0 0.0
    %1490 = vmatpush1.msra.mxu0 0.0
    %1491 = vmatprep.subr.mxu0 0.0
    %1492 = vmatpush1.msra.mxu0 0.0
    %1493 = vmatprep.subr.mxu0 0.0
    %1494 = vmatpush1.msra.mxu0 0.0
    %1495 = vmatprep.subr.mxu0 0.0
    %1496 = vmatpush1.msra.mxu0 0.0
    %1497 = vmatprep.subr.mxu0 0.0
    %1498 = vmatpush1.msra.mxu0 0.0
    %1499 = vmatprep.subr.mxu0 0.0
    %1500 = vmatpush1.msra.mxu0 0.0
    %1501 = vmatprep.subr.mxu0 0.0
    %1502 = vmatpush1.msra.mxu0 0.0
    %1503 = vmatprep.subr.mxu0 0.0
    %1504 = vmatpush1.msra.mxu0 0.0
    %1505 = vmatprep.subr.mxu0 0.0
    %1506 = vmatpush1.msra.mxu0 0.0
    %1507 = vmatprep.mubr.f32.mxu0 0.0
    %1508 = vmatmul.mubr.f32.gmra.mrb[0].mxu0 %v1441
    %v1509 = vpop.f32.mrb[0].mxu0
    %v1510 = vadd.f32 0.0, %v1509
    %v1511 = vpop.f32.mrb[0].mxu0
    %1512 = vdwg.mxu0
    %v1513 = vadd.f32 %v1440, %v1510
    %v1514 = vtanh.pop %v1513
    %v1517 = vunpack.c.l.s4 1983009808
    %v1518 = vunpack.c.0.s8 %v1517
    %v1519 = vlaneseq
    %v1520 = vshrl.u32 %v1519, 7
    %v1521 = vsub.s32 %v1518, %v1520
    %v1522 = vrot.slane %v1514, %v1521
    %1523 = vrot.lane.b32.xlu0 %v1522, 96
    %v1524 = vpop.permute.xlu0 %1523
    %1526 = vst.msk [vmem:[#allocation3 + $0x2] sm:$0x3] %vm1187, %v1524
    %v1527 = vld [vmem:[#allocation3] sm:$0xf]
    %v1528 = vld [vmem:[%s7] sm:$0xff]
    %v1529 = vld [vmem:[%s7 + $0x8] sm:$0xff]
    %v1530 = vld [vmem:[%s7 + $0x10] sm:$0xff]
    %v1531 = vld [vmem:[%s7 + $0x18] sm:$0xff]
    %v1532 = vld [vmem:[%s7 + $0x20] sm:$0xff]
    %v1533 = vld [vmem:[%s7 + $0x28] sm:$0xff]
    %v1534 = vld [vmem:[%s7 + $0x30] sm:$0xff]
    %v1535 = vld [vmem:[%s7 + $0x38] sm:$0xff]
    %v1536 = vld [vmem:[%s7 + $0x40] sm:$0xff]
    %v1537 = vld [vmem:[%s7 + $0x48] sm:$0xff]
    %v1538 = vld [vmem:[%s7 + $0x50] sm:$0xff]
    %v1539 = vld [vmem:[%s7 + $0x58] sm:$0xff]
    %v1540 = vld [vmem:[%s7 + $0x60] sm:$0xff]
    %v1541 = vld [vmem:[%s7 + $0x68] sm:$0xff]
    %v1542 = vld [vmem:[%s7 + $0x70] sm:$0xff]
    %v1543 = vld [vmem:[%s7 + $0x78] sm:$0xff]
    %v1544 = vld [vmem:[%s7 + $0x80] sm:$0xff]
    %v1545 = vld [vmem:[%s7 + $0x88] sm:$0xff]
    %v1546 = vld [vmem:[%s7 + $0x90] sm:$0xff]
    %v1547 = vld [vmem:[%s7 + $0x98] sm:$0xff]
    %v1548 = vld [vmem:[%s7 + $0xa0] sm:$0xff]
    %v1549 = vld [vmem:[%s7 + $0xa8] sm:$0xff]
    %v1550 = vld [vmem:[%s7 + $0xb0] sm:$0xff]
    %v1551 = vld [vmem:[%s7 + $0xb8] sm:$0xff]
    %v1552 = vld [vmem:[%s7 + $0xc0] sm:$0xff]
    %v1553 = vld [vmem:[%s7 + $0xc8] sm:$0xff]
    %v1554 = vld [vmem:[%s7 + $0xd0] sm:$0xff]
    %v1555 = vld [vmem:[%s7 + $0xd8] sm:$0xff]
    %v1556 = vld [vmem:[%s7 + $0xe0] sm:$0xff]
    %v1557 = vld [vmem:[%s7 + $0xe8] sm:$0xff]
    %v1558 = vld [vmem:[%s7 + $0xf0] sm:$0xff]
    %v1559 = vld [vmem:[%s7 + $0xf8] sm:$0xff]
    %v1560 = vld [vmem:[%s8] sm:$0x1]
    %v1562 = vlaneseq
    %v1563 = vshrl.u32 %v1562, 7
    %v1564 = vsub.s32 0, %v1563
    %v1565 = vrot.slane %v1560, %v1564
    %v1569 = vunpack.c.l.s4 1983009808
    %v1570 = vunpack.c.0.s8 %v1569
    %v1571 = vlaneseq
    %v1572 = vshrl.u32 %v1571, 7
    %v1573 = vsub.s32 %v1570, %v1572
    %v1574 = vrot.slane %v1527, %v1573
    %v1575 = vcombine.high %v1574, %v1574
    %1578 = vmatprep.subr.mxu0 0.0
    %1579 = vmatpush1.msra.mxu0 %v1528
    %1580 = vmatprep.subr.mxu0 0.0
    %1581 = vmatpush1.msra.mxu0 %v1529
    %1582 = vmatprep.subr.mxu0 0.0
    %1583 = vmatpush1.msra.mxu0 %v1530
    %1584 = vmatprep.subr.mxu0 0.0
    %1585 = vmatpush1.msra.mxu0 %v1531
    %1586 = vmatprep.subr.mxu0 0.0
    %1587 = vmatpush1.msra.mxu0 %v1532
    %1588 = vmatprep.subr.mxu0 0.0
    %1589 = vmatpush1.msra.mxu0 %v1533
    %1590 = vmatprep.subr.mxu0 0.0
    %1591 = vmatpush1.msra.mxu0 %v1534
    %1592 = vmatprep.subr.mxu0 0.0
    %1593 = vmatpush1.msra.mxu0 %v1535
    %1594 = vmatprep.subr.mxu0 0.0
    %1595 = vmatpush1.msra.mxu0 %v1536
    %1596 = vmatprep.subr.mxu0 0.0
    %1597 = vmatpush1.msra.mxu0 %v1537
    %1598 = vmatprep.subr.mxu0 0.0
    %1599 = vmatpush1.msra.mxu0 %v1538
    %1600 = vmatprep.subr.mxu0 0.0
    %1601 = vmatpush1.msra.mxu0 %v1539
    %1602 = vmatprep.subr.mxu0 0.0
    %1603 = vmatpush1.msra.mxu0 %v1540
    %1604 = vmatprep.subr.mxu0 0.0
    %1605 = vmatpush1.msra.mxu0 %v1541
    %1606 = vmatprep.subr.mxu0 0.0
    %1607 = vmatpush1.msra.mxu0 %v1542
    %1608 = vmatprep.subr.mxu0 0.0
    %1609 = vmatpush1.msra.mxu0 %v1543
    %1610 = vmatprep.subr.mxu0 0.0
    %1611 = vmatpush1.msra.mxu0 %v1544
    %1612 = vmatprep.subr.mxu0 0.0
    %1613 = vmatpush1.msra.mxu0 %v1545
    %1614 = vmatprep.subr.mxu0 0.0
    %1615 = vmatpush1.msra.mxu0 %v1546
    %1616 = vmatprep.subr.mxu0 0.0
    %1617 = vmatpush1.msra.mxu0 %v1547
    %1618 = vmatprep.subr.mxu0 0.0
    %1619 = vmatpush1.msra.mxu0 %v1548
    %1620 = vmatprep.subr.mxu0 0.0
    %1621 = vmatpush1.msra.mxu0 %v1549
    %1622 = vmatprep.subr.mxu0 0.0
    %1623 = vmatpush1.msra.mxu0 %v1550
    %1624 = vmatprep.subr.mxu0 0.0
    %1625 = vmatpush1.msra.mxu0 %v1551
    %1626 = vmatprep.subr.mxu0 0.0
    %1627 = vmatpush1.msra.mxu0 %v1552
    %1628 = vmatprep.subr.mxu0 0.0
    %1629 = vmatpush1.msra.mxu0 %v1553
    %1630 = vmatprep.subr.mxu0 0.0
    %1631 = vmatpush1.msra.mxu0 %v1554
    %1632 = vmatprep.subr.mxu0 0.0
    %1633 = vmatpush1.msra.mxu0 %v1555
    %1634 = vmatprep.subr.mxu0 0.0
    %1635 = vmatpush1.msra.mxu0 %v1556
    %1636 = vmatprep.subr.mxu0 0.0
    %1637 = vmatpush1.msra.mxu0 %v1557
    %1638 = vmatprep.subr.mxu0 0.0
    %1639 = vmatpush1.msra.mxu0 %v1558
    %1640 = vmatprep.subr.mxu0 0.0
    %1641 = vmatpush1.msra.mxu0 %v1559
    %1642 = vmatprep.mubr.f32.mxu0 %v1575
    %1643 = vmatmul.mubr.f32.gmra.mrb[0].mxu0 %v1574
    %v1644 = vpop.f32.mrb[0].mxu0
    %v1645 = vadd.f32 %v1565, %v1644
    %v1646 = vpop.f32.mrb[0].mxu0
    %1647 = vdwg.mxu0
    %vm1648 = vcmask 74752
    %1649 = vst.msk [vmem:[#allocation4] sm:$0x3] %vm1648, %v1645
    // Predicated region
    $region38: #{tpu_custom_call.1} parent=1 // pred_check
      _
    $region39: #{tpu_custom_call.1} parent=1 // pred_check_branch
      %1651 = sbr.rel (0) target = $region41
    $region40: #{tpu_custom_call.1} parent=1 // pred_region
      %s1653 = ssub.s32 32, 32
      %1654 = vsyncadd [#allocation5], %s1653
      %s1656 = sshll.u32 [#allocation4], 4
      %s1657 = int_to_ptr.vmem [resolvable:$true] %s1656
      %1659 = dma.vmem_to_hbm [thread:$0]  %s1657, 32, %s9, [#allocation5]
    $region41: #{tpu_custom_call.1} parent=1 // pred_fallthru
      _
    // Predicated region
    $region42: #{tpu_custom_call.1} parent=1 // pred_check
      _
    $region43: #{tpu_custom_call.1} parent=1 // pred_check_branch
      %1661 = sbr.rel (0) target = $region45
    $region44: #{tpu_custom_call.1} parent=1 // pred_region
      %1662 = dma.done [#allocation5], 32
    $region45: #{tpu_custom_call.1} parent=1 // pred_fallthru
      _
    %1663 = vsyncpa [#allocation5], 1

</llo_original>
